<compile_context>
chip_gen: v7x
topology: tpu7x:2x2x1
jax: 0.10.0
libtpu: 0.0.40
codegen_flags: <defaults>
</compile_context>

<pallas_src>
import functools

import jax
import jax.numpy as jnp
from jax.experimental import pallas as pl
from jax.experimental.pallas import tpu as pltpu

D_IN, D_H1, D_H2, D_OUT = 28 * 28, 512, 256, 10
# layer_cumsum = cumsum([0, 784, 512, 256, 10]) = [0, 784, 1296, 1552, 1562]
_U1_LO, _U2_LO, _U3_LO, _U_END = 784, 1296, 1552, 1562

_TB_MAX = 256     # max batch tile: multi-step pipelined grid, small VMEM
_TB_SPLIT = 256   # if B >= this, force >= 2 grid steps (pipelining / 2 TCs)
_TB_ALIGN = 16    # sublane alignment that also satisfies bf16 (16,128) packing


def _round_up(n, m):
    return (n + m - 1) // m * m


def _pick_tiling(B):
    """Balanced batch tiling (review item 2/4): waste bounded by the 16-row
    alignment instead of up to 2x, and >= 2 grid steps once B >= 256."""
    num_tiles = pl.cdiv(B, _TB_MAX)
    if num_tiles < 2 and B >= _TB_SPLIT:
        num_tiles = 2
    tb = _round_up(pl.cdiv(B, num_tiles), _TB_ALIGN)
    return num_tiles, tb, num_tiles * tb


def _make_mlp_kernel(gated: bool, with_hs: bool):
    """Build a kernel body specialized for (gated, with_hs)."""

    def kernel(*refs):
        refs = list(refs)
        x_ref = refs[0]
        w1_ref, b1_ref, w2_ref, b2_ref, w3_ref, b3_ref = refs[1:7]
        idx = 7
        if gated:
            u1_ref, u2_ref, u3_ref = refs[7:10]
            idx = 10
        out_ref = refs[idx]
        if with_hs:
            h1_ref, h2_ref, h3_ref = refs[idx + 1:idx + 4]

        # layer 0: Linear(784, 512) -> ReLU -> (optional) gate
        xb = x_ref[...].astype(jnp.bfloat16)
        h1 = jnp.dot(xb, w1_ref[...], preferred_element_type=jnp.float32)
        h1 = jnp.maximum(h1 + b1_ref[...], 0.0)
        if gated:
            h1 = h1 * u1_ref[...]            # bf16 gate promotes to f32
        h1b = h1.astype(jnp.bfloat16)        # shared: hs writeback + next matmul
        if with_hs:
            h1_ref[...] = h1b

        # layer 1: Linear(512, 256) -> ReLU -> (optional) gate
        h2 = jnp.dot(h1b, w2_ref[...], preferred_element_type=jnp.float32)
        h2 = jnp.maximum(h2 + b2_ref[...], 0.0)
        if gated:
            h2 = h2 * u2_ref[...]
        h2b = h2.astype(jnp.bfloat16)
        if with_hs:
            h2_ref[...] = h2b

        # layer 2: Linear(256, 10) -> (optional) gate
        h3 = jnp.dot(h2b, w3_ref[...],
                     preferred_element_type=jnp.float32) + b3_ref[...]
        if gated:
            h3 = h3 * u3_ref[...]
        if with_hs:
            h3_ref[...] = h3.astype(jnp.bfloat16)

        # softmax over dim=1 on the f32 logits (exact reciprocal so rows
        # normalize exactly; approx=True would be a micro-win only)
        m = jnp.max(h3, axis=1, keepdims=True)
        e = jnp.exp(h3 - m)
        out_ref[...] = e * pl.reciprocal(jnp.sum(e, axis=1, keepdims=True),
                                         approx=False)

    return kernel


@functools.partial(jax.jit, static_argnames=("cond_drop", "return_hs"))
def mlp_forward(x, params, cond_drop=False, us=None, return_hs=True):
    """Mirrors Mlp.forward.  Returns (softmax_out, hs) with
    hs = [x, h1, h2, h3] (h1/h2/h3 in bf16); when return_hs=False,
    returns (softmax_out, None)."""
    w1, b1, w2, b2, w3, b3 = params
    # No-op casts when params are stored bf16 (init_params does that); keeps
    # the kernel correct if f32 params are passed by a caller.
    w1 = w1.astype(jnp.bfloat16)
    w2 = w2.astype(jnp.bfloat16)
    w3 = w3.astype(jnp.bfloat16)

    x_orig = x
    B = x.shape[0]
    num_tiles, TB, Bp = _pick_tiling(B)
    grid = (num_tiles,)

    if Bp != B:
        x = jnp.pad(x, ((0, Bp - B), (0, 0)))

    def bt(width):  # batch-tiled spec (software-pipelined across the grid)
        return pl.BlockSpec((TB, width), lambda i: (i, 0))

    def pin(rows, cols):  # constant index_map -> VMEM-resident across the grid
        return pl.BlockSpec((rows, cols), lambda i: (0, 0))

    ins = [x,
           w1, b1.reshape(1, D_H1),
           w2, b2.reshape(1, D_H2),
           w3, b3.reshape(1, D_OUT)]
    in_specs = [bt(D_IN),
                pin(D_IN, D_H1), pin(1, D_H1),
                pin(D_H1, D_H2), pin(1, D_H2),
                pin(D_H2, D_OUT), pin(1, D_OUT)]

    gate_bytes = 0
    if cond_drop:
        if us is None:
            raise ValueError("us should be given")
        # reshape(B, -1) keeps the batch dim even for B==1 (squeeze-bug fix);
        # the slice materializes a copy anyway, so the bf16 cast is free.
        us2 = us.reshape(us.shape[0], -1).astype(jnp.bfloat16)
        u1 = us2[:, _U1_LO:_U2_LO]
        u2 = us2[:, _U2_LO:_U3_LO]
        u3 = us2[:, _U3_LO:_U_END]
        if Bp != B:
            u1 = jnp.pad(u1, ((0, Bp - B), (0, 0)))
            u2 = jnp.pad(u2, ((0, Bp - B), (0, 0)))
            u3 = jnp.pad(u3, ((0, Bp - B), (0, 0)))
        ins += [u1, u2, u3]
        in_specs += [bt(D_H1), bt(D_H2), bt(D_OUT)]
        gate_bytes = 2 * Bp * (D_H1 + D_H2 + D_OUT)   # bf16 gates

    out_shapes = [jax.ShapeDtypeStruct((Bp, D_OUT), jnp.float32)]
    out_specs = [bt(D_OUT)]
    hs_bytes = 0
    if return_hs:
        out_shapes += [jax.ShapeDtypeStruct((Bp, D_H1), jnp.bfloat16),
                       jax.ShapeDtypeStruct((Bp, D_H2), jnp.bfloat16),
                       jax.ShapeDtypeStruct((Bp, D_OUT), jnp.bfloat16)]
        out_specs += [bt(D_H1), bt(D_H2), bt(D_OUT)]
        hs_bytes = 2 * Bp * (D_H1 + D_H2 + D_OUT)     # bf16 hs writeback

    cost = pl.CostEstimate(
        flops=2 * Bp * (D_IN * D_H1 + D_H1 * D_H2 + D_H2 * D_OUT),
        transcendentals=Bp * D_OUT,
        bytes_accessed=(2 * (D_IN * D_H1 + D_H1 * D_H2 + D_H2 * D_OUT)  # bf16 W
                        + 4 * (D_H1 + D_H2 + D_OUT)                     # f32 bias
                        + 4 * Bp * (D_IN + D_OUT)                       # x, softmax
                        + gate_bytes + hs_bytes),
    )

    results = pl.pallas_call(
        _make_mlp_kernel(gated=cond_drop, with_hs=return_hs),
        out_shape=tuple(out_shapes),
        grid=grid,
        in_specs=in_specs,
        out_specs=tuple(out_specs),
        compiler_params=pltpu.CompilerParams(
            dimension_semantics=("parallel",),
            vmem_limit_bytes=32 * 1024 * 1024),
        cost_estimate=cost,
    )(*ins)

    if return_hs:
        out, h1, h2, h3 = results
        return out[:B], [x_orig, h1[:B], h2[:B], h3[:B]]
    (out,) = results
    return out[:B], None


def init_params(key):
    """nn.Linear-style init (uniform +-1/sqrt(fan_in)).  Weights are stored
    transposed as (in, out) AND in bf16 (cast hoisted out of the jitted
    forward per the perf review); biases stay f32."""
    params = []
    dims = [(D_IN, D_H1), (D_H1, D_H2), (D_H2, D_OUT)]
    for (fin, fout) in dims:
        key, kw, kb = jax.random.split(key, 3)
        bound = 1.0 / (fin ** 0.5)
        w = jax.random.uniform(kw, (fin, fout), jnp.float32, -bound, bound)
        b = jax.random.uniform(kb, (fout,), jnp.float32, -bound, bound)
        params += [w.astype(jnp.bfloat16), b]
    return tuple(params)


def _reference(x, params, u1=None, u2=None, u3=None):
    """Pure-JAX reference mirroring the kernel's dtype strategy (bf16 matmul
    operands, f32 accumulation) for apples-to-apples comparison."""
    w1, b1, w2, b2, w3, b3 = params
    w1b, w2b, w3b = (w.astype(jnp.bfloat16) for w in (w1, w2, w3))
    h1 = jnp.maximum(jnp.dot(x.astype(jnp.bfloat16), w1b,
                             preferred_element_type=jnp.float32) + b1, 0.0)
    if u1 is not None:
        h1 = h1 * u1
    h2 = jnp.maximum(jnp.dot(h1.astype(jnp.bfloat16), w2b,
                             preferred_element_type=jnp.float32) + b2, 0.0)
    if u2 is not None:
        h2 = h2 * u2
    h3 = jnp.dot(h2.astype(jnp.bfloat16), w3b,
                 preferred_element_type=jnp.float32) + b3
    if u3 is not None:
        h3 = h3 * u3
    return jax.nn.softmax(h3, axis=1), [x, h1, h2, h3]


if __name__ == "__main__":
    key = jax.random.PRNGKey(0)
    kx, kp, ku, kx2, ku2 = jax.random.split(key, 5)

    B = 8
    x = jax.random.normal(kx, (B, D_IN), jnp.float32)
    params = init_params(kp)

    OUT_TOL = dict(atol=2e-3, rtol=2e-3)
    HS_TOL = dict(atol=2e-2, rtol=2e-2)   # hs are returned in bf16

    # ---- default path (cond_drop=False) ----
    out, hs = mlp_forward(x, params, cond_drop=False)
    jax.block_until_ready(out)
    ref_out, ref_hs = _reference(x, params)
    assert jnp.allclose(out, ref_out, **OUT_TOL)
    for a, b in zip(hs, ref_hs):
        assert a.shape == b.shape
        assert jnp.allclose(a.astype(jnp.float32), b, **HS_TOL)

    # ---- cond_drop path with a gating vector `us` of width 1562 ----
    us = jax.random.bernoulli(ku, 0.7, (B, 1, _U_END)).astype(jnp.float32)
    out_cd, hs_cd = mlp_forward(x, params, cond_drop=True, us=us)
    jax.block_until_ready(out_cd)
    us2 = us.reshape(B, -1)
    ref_out_cd, ref_hs_cd = _reference(
        x, params,
        u1=us2[:, _U1_LO:_U2_LO], u2=us2[:, _U2_LO:_U3_LO],
        u3=us2[:, _U3_LO:_U_END])
    assert jnp.allclose(out_cd, ref_out_cd, **OUT_TOL)
    for a, b in zip(hs_cd, ref_hs_cd):
        assert jnp.allclose(a.astype(jnp.float32), b, **HS_TOL)

    # ---- inference-only path (no hs writeback) ----
    out_fast, hs_none = mlp_forward(x, params, cond_drop=False, return_hs=False)
    jax.block_until_ready(out_fast)
    assert hs_none is None
    assert jnp.allclose(out_fast, ref_out, **OUT_TOL)

    # ---- multi-tile pipelined path (grid >= 2 steps, uneven batch) ----
    B2 = 272                       # -> 2 tiles of 144, Bp = 288
    x2 = jax.random.normal(kx2, (B2, D_IN), jnp.float32)
    us_big = jax.random.bernoulli(ku2, 0.7, (B2, 1, _U_END)).astype(jnp.float32)
    out_mt, hs_mt = mlp_forward(x2, params, cond_drop=True, us=us_big)
    jax.block_until_ready(out_mt)
    us_big2 = us_big.reshape(B2, -1)
    ref_out_mt, ref_hs_mt = _reference(
        x2, params,
        u1=us_big2[:, _U1_LO:_U2_LO], u2=us_big2[:, _U2_LO:_U3_LO],
        u3=us_big2[:, _U3_LO:_U_END])
    assert out_mt.shape == (B2, D_OUT)
    assert jnp.allclose(out_mt, ref_out_mt, **OUT_TOL)
    for a, b in zip(hs_mt, ref_hs_mt):
        assert jnp.allclose(a.astype(jnp.float32), b, **HS_TOL)

    print("KERNEL_OK")
</pallas_src>

<mosaic_0001>
module attributes {stable_mosaic.version = 11 : i64} {
  func.func @kernel(%arg0: i32, %arg1: memref<16x784xf32, #tpu.memory_space<vmem>>, %arg2: memref<784x512xbf16, #tpu.memory_space<vmem>>, %arg3: memref<1x512xf32, #tpu.memory_space<vmem>>, %arg4: memref<512x256xbf16, #tpu.memory_space<vmem>>, %arg5: memref<1x256xf32, #tpu.memory_space<vmem>>, %arg6: memref<256x10xbf16, #tpu.memory_space<vmem>>, %arg7: memref<1x10xf32, #tpu.memory_space<vmem>>, %arg8: memref<16x10xf32, #tpu.memory_space<vmem>>, %arg9: memref<16x512xbf16, #tpu.memory_space<vmem>>, %arg10: memref<16x256xbf16, #tpu.memory_space<vmem>>, %arg11: memref<16x10xbf16, #tpu.memory_space<vmem>>) attributes {dimension_semantics = [#tpu.dimension_semantics<parallel>], iteration_bounds = array<i64: 1>, scalar_prefetch = 0 : i64, scratch_operands = 0 : i64, tpu.core_type = #tpu.core_type<tc>, window_params = [{transform_indices = @transform_0, window_bounds = array<i64: 16, 784>}, {pipeline_mode = #tpu.pipeline_mode<synchronous>, transform_indices = @transform_1, window_bounds = array<i64: 784, 512>}, {pipeline_mode = #tpu.pipeline_mode<synchronous>, transform_indices = @transform_2, window_bounds = array<i64: 1, 512>}, {pipeline_mode = #tpu.pipeline_mode<synchronous>, transform_indices = @transform_3, window_bounds = array<i64: 512, 256>}, {pipeline_mode = #tpu.pipeline_mode<synchronous>, transform_indices = @transform_4, window_bounds = array<i64: 1, 256>}, {pipeline_mode = #tpu.pipeline_mode<synchronous>, transform_indices = @transform_5, window_bounds = array<i64: 256, 10>}, {pipeline_mode = #tpu.pipeline_mode<synchronous>, transform_indices = @transform_6, window_bounds = array<i64: 1, 10>}, {transform_indices = @transform_7, window_bounds = array<i64: 16, 10>}, {transform_indices = @transform_8, window_bounds = array<i64: 16, 512>}, {transform_indices = @transform_9, window_bounds = array<i64: 16, 256>}, {transform_indices = @transform_10, window_bounds = array<i64: 16, 10>}]} {
    %c0 = arith.constant 0 : index
    %c0_0 = arith.constant 0 : index
    %0 = vector.load %arg1[%c0, %c0_0] : memref<16x784xf32, #tpu.memory_space<vmem>>, vector<16x784xf32>
    %1 = arith.truncf %0 : vector<16x784xf32> to vector<16x784xbf16>
    %c0_1 = arith.constant 0 : index
    %c0_2 = arith.constant 0 : index
    %2 = vector.load %arg2[%c0_1, %c0_2] : memref<784x512xbf16, #tpu.memory_space<vmem>>, vector<784x512xbf16>
    %cst = arith.constant dense<0.000000e+00> : vector<16x512xf32>
    %3 = tpu.matmul %1, %2, %cst {dimension_numbers = #tpu.dot_dimension_numbers<[1], [0], [0], [1], [0, 0, 1, 1], [], []>} : vector<16x784xbf16>, vector<784x512xbf16>, vector<16x512xf32> -> vector<16x512xf32>
    %c0_3 = arith.constant 0 : index
    %c0_4 = arith.constant 0 : index
    %4 = vector.load %arg3[%c0_3, %c0_4] : memref<1x512xf32, #tpu.memory_space<vmem>>, vector<1x512xf32>
    %5 = vector.broadcast %4 : vector<1x512xf32> to vector<16x512xf32>
    %6 = arith.addf %3, %5 : vector<16x512xf32>
    %cst_5 = arith.constant 0.000000e+00 : f32
    %7 = vector.broadcast %cst_5 : f32 to vector<16x512xf32>
    %8 = arith.maximumf %6, %7 : vector<16x512xf32>
    %9 = arith.truncf %8 : vector<16x512xf32> to vector<16x512xbf16>
    %c0_6 = arith.constant 0 : index
    %c0_7 = arith.constant 0 : index
    %10 = vector.load %arg9[%c0_6, %c0_7] : memref<16x512xbf16, #tpu.memory_space<vmem>>, vector<16x512xbf16>
    tpu.vector_store %arg9[%c0_6, %c0_7], %9 {strides = array<i32>} : memref<16x512xbf16, #tpu.memory_space<vmem>>, vector<16x512xbf16>,
    %c0_8 = arith.constant 0 : index
    %c0_9 = arith.constant 0 : index
    %11 = vector.load %arg4[%c0_8, %c0_9] : memref<512x256xbf16, #tpu.memory_space<vmem>>, vector<512x256xbf16>
    %cst_10 = arith.constant dense<0.000000e+00> : vector<16x256xf32>
    %12 = tpu.matmul %9, %11, %cst_10 {dimension_numbers = #tpu.dot_dimension_numbers<[1], [0], [0], [1], [0, 0, 1, 1], [], []>} : vector<16x512xbf16>, vector<512x256xbf16>, vector<16x256xf32> -> vector<16x256xf32>
    %c0_11 = arith.constant 0 : index
    %c0_12 = arith.constant 0 : index
    %13 = vector.load %arg5[%c0_11, %c0_12] : memref<1x256xf32, #tpu.memory_space<vmem>>, vector<1x256xf32>
    %14 = vector.broadcast %13 : vector<1x256xf32> to vector<16x256xf32>
    %15 = arith.addf %12, %14 : vector<16x256xf32>
    %cst_13 = arith.constant 0.000000e+00 : f32
    %16 = vector.broadcast %cst_13 : f32 to vector<16x256xf32>
    %17 = arith.maximumf %15, %16 : vector<16x256xf32>
    %18 = arith.truncf %17 : vector<16x256xf32> to vector<16x256xbf16>
    %c0_14 = arith.constant 0 : index
    %c0_15 = arith.constant 0 : index
    %19 = vector.load %arg10[%c0_14, %c0_15] : memref<16x256xbf16, #tpu.memory_space<vmem>>, vector<16x256xbf16>
    tpu.vector_store %arg10[%c0_14, %c0_15], %18 {strides = array<i32>} : memref<16x256xbf16, #tpu.memory_space<vmem>>, vector<16x256xbf16>,
    %c0_16 = arith.constant 0 : index
    %c0_17 = arith.constant 0 : index
    %20 = vector.load %arg6[%c0_16, %c0_17] : memref<256x10xbf16, #tpu.memory_space<vmem>>, vector<256x10xbf16>
    %cst_18 = arith.constant dense<0.000000e+00> : vector<16x10xf32>
    %21 = tpu.matmul %18, %20, %cst_18 {dimension_numbers = #tpu.dot_dimension_numbers<[1], [0], [0], [1], [0, 0, 1, 1], [], []>} : vector<16x256xbf16>, vector<256x10xbf16>, vector<16x10xf32> -> vector<16x10xf32>
    %c0_19 = arith.constant 0 : index
    %c0_20 = arith.constant 0 : index
    %22 = vector.load %arg7[%c0_19, %c0_20] : memref<1x10xf32, #tpu.memory_space<vmem>>, vector<1x10xf32>
    %23 = vector.broadcast %22 : vector<1x10xf32> to vector<16x10xf32>
    %24 = arith.addf %21, %23 : vector<16x10xf32>
    %25 = arith.truncf %24 : vector<16x10xf32> to vector<16x10xbf16>
    %c0_21 = arith.constant 0 : index
    %c0_22 = arith.constant 0 : index
    %26 = vector.load %arg11[%c0_21, %c0_22] : memref<16x10xbf16, #tpu.memory_space<vmem>>, vector<16x10xbf16>
    tpu.vector_store %arg11[%c0_21, %c0_22], %25 {strides = array<i32>} : memref<16x10xbf16, #tpu.memory_space<vmem>>, vector<16x10xbf16>,
    %cst_23 = arith.constant dense<0xFF800000> : vector<16xf32>
    %27 = vector.multi_reduction <maximumf>, %24, %cst_23 [1] : vector<16x10xf32> to vector<16xf32>
    %28 = vector.shape_cast %27 : vector<16xf32> to vector<16x1xf32>
    %29 = vector.broadcast %28 : vector<16x1xf32> to vector<16x10xf32>
    %30 = arith.subf %24, %29 : vector<16x10xf32>
    %31 = math.exp %30 : vector<16x10xf32>
    %cst_24 = arith.constant dense<0.000000e+00> : vector<16xf32>
    %32 = vector.multi_reduction <add>, %31, %cst_24 [1] : vector<16x10xf32> to vector<16xf32>
    %33 = vector.shape_cast %32 : vector<16xf32> to vector<16x1xf32>
    %34 = tpu.reciprocal %33 : vector<16x1xf32> -> vector<16x1xf32>
    %35 = vector.broadcast %34 : vector<16x1xf32> to vector<16x10xf32>
    %36 = arith.mulf %31, %35 : vector<16x10xf32>
    %c0_25 = arith.constant 0 : index
    %c0_26 = arith.constant 0 : index
    %37 = vector.load %arg8[%c0_25, %c0_26] : memref<16x10xf32, #tpu.memory_space<vmem>>, vector<16x10xf32>
    tpu.vector_store %arg8[%c0_25, %c0_26], %36 {strides = array<i32>} : memref<16x10xf32, #tpu.memory_space<vmem>>, vector<16x10xf32>,
    return
  }
  func.func @transform_0(%arg0: i32) -> (i32, i32) {
    %c0_i32 = arith.constant 0 : i32
    %c0_i32_0 = arith.constant 0 : i32
    return %arg0, %c0_i32 : i32, i32
  }
  func.func @transform_1(%arg0: i32) -> (i32, i32) {
    %c0_i32 = arith.constant 0 : i32
    %c0_i32_0 = arith.constant 0 : i32
    %c0_i32_1 = arith.constant 0 : i32
    return %c0_i32, %c0_i32_0 : i32, i32
  }
  func.func @transform_2(%arg0: i32) -> (i32, i32) {
    %c0_i32 = arith.constant 0 : i32
    %c0_i32_0 = arith.constant 0 : i32
    %c0_i32_1 = arith.constant 0 : i32
    return %c0_i32, %c0_i32_0 : i32, i32
  }
  func.func @transform_3(%arg0: i32) -> (i32, i32) {
    %c0_i32 = arith.constant 0 : i32
    %c0_i32_0 = arith.constant 0 : i32
    %c0_i32_1 = arith.constant 0 : i32
    return %c0_i32, %c0_i32_0 : i32, i32
  }
  func.func @transform_4(%arg0: i32) -> (i32, i32) {
    %c0_i32 = arith.constant 0 : i32
    %c0_i32_0 = arith.constant 0 : i32
    %c0_i32_1 = arith.constant 0 : i32
    return %c0_i32, %c0_i32_0 : i32, i32
  }
  func.func @transform_5(%arg0: i32) -> (i32, i32) {
    %c0_i32 = arith.constant 0 : i32
    %c0_i32_0 = arith.constant 0 : i32
    %c0_i32_1 = arith.constant 0 : i32
    return %c0_i32, %c0_i32_0 : i32, i32
  }
  func.func @transform_6(%arg0: i32) -> (i32, i32) {
    %c0_i32 = arith.constant 0 : i32
    %c0_i32_0 = arith.constant 0 : i32
    %c0_i32_1 = arith.constant 0 : i32
    return %c0_i32, %c0_i32_0 : i32, i32
  }
  func.func @transform_7(%arg0: i32) -> (i32, i32) {
    %c0_i32 = arith.constant 0 : i32
    %c0_i32_0 = arith.constant 0 : i32
    return %arg0, %c0_i32 : i32, i32
  }
  func.func @transform_8(%arg0: i32) -> (i32, i32) {
    %c0_i32 = arith.constant 0 : i32
    %c0_i32_0 = arith.constant 0 : i32
    return %arg0, %c0_i32 : i32, i32
  }
  func.func @transform_9(%arg0: i32) -> (i32, i32) {
    %c0_i32 = arith.constant 0 : i32
    %c0_i32_0 = arith.constant 0 : i32
    return %arg0, %c0_i32 : i32, i32
  }
  func.func @transform_10(%arg0: i32) -> (i32, i32) {
    %c0_i32 = arith.constant 0 : i32
    %c0_i32_0 = arith.constant 0 : i32
    return %arg0, %c0_i32 : i32, i32
  }
}

</mosaic_0001>

<llo_original>
// kernel: mlp_forward.1
$region0: #{mlp_forward.1}
  #allocation0 [shape = 'u32[]', space=smem, size = 0x4, offset = 0x4, fixed_abs, tag = 'smem constant byte address 0x4 - core index']
  #allocation1 [shape = 'u32[144,128]{1,0:T(1,128)}', space=vmem, size = 0x12000, scoped, tag = 'internal scratch']
  %s0 = inlined_call_operand.vmem [shape: f32[16,784], index: 0, kind: input, shape index: {}]
  %s1 = inlined_call_operand.hbm [shape: bf16[784,512], index: 1, kind: input, shape index: {}]
  %s2 = inlined_call_operand.vmem [shape: f32[1,512], index: 2, kind: input, shape index: {}]
  %s3 = inlined_call_operand.hbm [shape: bf16[512,256], index: 3, kind: input, shape index: {}]
  %s4 = inlined_call_operand.vmem [shape: f32[1,256], index: 4, kind: input, shape index: {}]
  %s5 = inlined_call_operand.vmem [shape: bf16[256,10], index: 5, kind: input, shape index: {}]
  %s6 = inlined_call_operand.vmem [shape: f32[1,10], index: 6, kind: input, shape index: {}]
  %s7 = inlined_call_operand.vmem [shape: f32[16,10], index: 7, kind: output, shape index: {0}]
  %s8 = inlined_call_operand.vmem [shape: bf16[16,512], index: 8, kind: output, shape index: {1}]
  %s9 = inlined_call_operand.vmem [shape: bf16[16,256], index: 9, kind: output, shape index: {2}]
  %s10 = inlined_call_operand.vmem [shape: bf16[16,10], index: 10, kind: output, shape index: {3}]
  %11 = xla_tuple %s7, %s8, %s9, %s10
  %s12 = sld [smem:[#allocation0]]
  $region70: #{mlp_forward.1} parent=0
    _
  %s14 = ssub.s32 1, %s12
  %s15 = scalar_select 0, %s14, %s12
  $region1: #{mlp_forward.1} parent=0
    #allocation2 [shape = 'u8[802816]{0}', space=vmem, size = 0xc4000, scoped, tag = 'input window, operand 1, single buffered']
    #allocation3 [shape = 's32[1]{0}', space=sflag, size = 0x4, scoped, tag = 'scoped memory for mlp_forward.1']
    #allocation4 [shape = 'u8[262144]{0}', space=vmem, size = 0x40000, scoped, tag = 'input window, operand 3, single buffered']
    #allocation5 [shape = 's32[1]{0}', space=sflag, size = 0x4, scoped, tag = 'scoped memory for mlp_forward.1']
    %16 = vsyncpa [#allocation3], 0
    %17 = vsyncpa [#allocation5], 0
    // Predicated region
    $region2: #{mlp_forward.1} parent=1 // pred_check
      _
    $region3: #{mlp_forward.1} parent=1 // pred_check_branch
      %19 = sbr.rel (0) target = $region5
    $region4: #{mlp_forward.1} parent=1 // pred_region
      _
    $region5: #{mlp_forward.1} parent=1 // pred_fallthru
      _
    // Predicated region
    $region6: #{mlp_forward.1} parent=1 // pred_check
      _
    $region7: #{mlp_forward.1} parent=1 // pred_check_branch
      %21 = sbr.rel (0) target = $region9
    $region8: #{mlp_forward.1} parent=1 // pred_region
      %s23 = ssub.s32 25088, 25088
      %24 = vsyncadd [#allocation3], %s23
      %s25 = sshll.u32 [#allocation2], 4
      %s26 = int_to_ptr.vmem [resolvable:$true] %s25
      %31 = dma.hbm_to_vmem [thread:$0]  %s1, 25088, %s26, [#allocation3], 256, 256, 16
    $region9: #{mlp_forward.1} parent=1 // pred_fallthru
      _
    // Predicated region
    $region10: #{mlp_forward.1} parent=1 // pred_check
      _
    $region11: #{mlp_forward.1} parent=1 // pred_check_branch
      %33 = sbr.rel (0) target = $region13
    $region12: #{mlp_forward.1} parent=1 // pred_region
      _
    $region13: #{mlp_forward.1} parent=1 // pred_fallthru
      _
    // Predicated region
    $region14: #{mlp_forward.1} parent=1 // pred_check
      _
    $region15: #{mlp_forward.1} parent=1 // pred_check_branch
      %35 = sbr.rel (0) target = $region17
    $region16: #{mlp_forward.1} parent=1 // pred_region
      %s37 = ssub.s32 8192, 8192
      %38 = vsyncadd [#allocation5], %s37
      %s39 = sshll.u32 [#allocation4], 4
      %s40 = int_to_ptr.vmem [resolvable:$true] %s39
      %45 = dma.hbm_to_vmem [thread:$0]  %s3, 8192, %s40, [#allocation5], 128, 128, 8
    $region17: #{mlp_forward.1} parent=1 // pred_fallthru
      _
    // Predicated region
    $region18: #{mlp_forward.1} parent=1 // pred_check
      _
    $region19: #{mlp_forward.1} parent=1 // pred_check_branch
      %47 = sbr.rel (0) target = $region21
    $region20: #{mlp_forward.1} parent=1 // pred_region
      _
    $region21: #{mlp_forward.1} parent=1 // pred_fallthru
      _
    // Predicated region
    $region22: #{mlp_forward.1} parent=1 // pred_check
      _
    $region23: #{mlp_forward.1} parent=1 // pred_check_branch
      %49 = sbr.rel (0) target = $region25
    $region24: #{mlp_forward.1} parent=1 // pred_region
      _
    $region25: #{mlp_forward.1} parent=1 // pred_fallthru
      _
    // Predicated region
    $region26: #{mlp_forward.1} parent=1 // pred_check
      _
    $region27: #{mlp_forward.1} parent=1 // pred_check_branch
      %51 = sbr.rel (0) target = $region29
    $region28: #{mlp_forward.1} parent=1 // pred_region
      _
    $region29: #{mlp_forward.1} parent=1 // pred_fallthru
      _
    // Predicated region
    $region30: #{mlp_forward.1} parent=1 // pred_check
      _
    $region31: #{mlp_forward.1} parent=1 // pred_check_branch
      %53 = sbr.rel (0) target = $region33
    $region32: #{mlp_forward.1} parent=1 // pred_region
      %54 = dma.done [#allocation3], 25088
    $region33: #{mlp_forward.1} parent=1 // pred_fallthru
      _
    // Predicated region
    $region34: #{mlp_forward.1} parent=1 // pred_check
      _
    $region35: #{mlp_forward.1} parent=1 // pred_check_branch
      %56 = sbr.rel (0) target = $region37
    $region36: #{mlp_forward.1} parent=1 // pred_region
      %57 = dma.done [#allocation5], 8192
    $region37: #{mlp_forward.1} parent=1 // pred_fallthru
      _
    %v59 = vld [vmem:[%s0] sm:$0xff]
    %v60 = vld [vmem:[%s0 + $0x8] sm:$0xff]
    %v61 = vld [vmem:[%s0 + $0x10] sm:$0xff]
    %v62 = vld [vmem:[%s0 + $0x18] sm:$0xff]
    %v63 = vld [vmem:[%s0 + $0x20] sm:$0xff]
    %v64 = vld [vmem:[%s0 + $0x28] sm:$0xff]
    %v65 = vld [vmem:[%s0 + $0x30] sm:$0xff]
    %v66 = vld [vmem:[%s0 + $0x38] sm:$0xff]
    %v67 = vld [vmem:[%s0 + $0x40] sm:$0xff]
    %v68 = vld [vmem:[%s0 + $0x48] sm:$0xff]
    %v69 = vld [vmem:[%s0 + $0x50] sm:$0xff]
    %v70 = vld [vmem:[%s0 + $0x58] sm:$0xff]
    %v71 = vld [vmem:[%s0 + $0x60] sm:$0xff]
    %v72 = vld [vmem:[%s0 + $0x68] sm:$0xff]
    %v73 = vpack.c.bf16 %v66, %v59
    %v74 = vpack.c.bf16 %v67, %v60
    %v75 = vpack.c.bf16 %v68, %v61
    %v76 = vpack.c.bf16 %v69, %v62
    %v77 = vpack.c.bf16 %v70, %v63
    %v78 = vpack.c.bf16 %v71, %v64
    %v79 = vpack.c.bf16 %v72, %v65
    %v80 = vld [vmem:[#allocation2] sm:$0xff]
    %v81 = vld [vmem:[#allocation2 + $0x8] sm:$0xff]
    %v82 = vld [vmem:[#allocation2 + $0x10] sm:$0xff]
    %v83 = vld [vmem:[#allocation2 + $0x18] sm:$0xff]
    %v84 = vld [vmem:[#allocation2 + $0x20] sm:$0xff]
    %v85 = vld [vmem:[#allocation2 + $0x28] sm:$0xff]
    %v86 = vld [vmem:[#allocation2 + $0x30] sm:$0xff]
    %v87 = vld [vmem:[#allocation2 + $0x38] sm:$0xff]
    %v88 = vld [vmem:[#allocation2 + $0x40] sm:$0xff]
    %v89 = vld [vmem:[#allocation2 + $0x48] sm:$0xff]
    %v90 = vld [vmem:[#allocation2 + $0x50] sm:$0xff]
    %v91 = vld [vmem:[#allocation2 + $0x58] sm:$0xff]
    %v92 = vld [vmem:[#allocation2 + $0x60] sm:$0xff]
    %v93 = vld [vmem:[#allocation2 + $0x68] sm:$0xff]
    %v94 = vld [vmem:[#allocation2 + $0x70] sm:$0xff]
    %v95 = vld [vmem:[#allocation2 + $0x78] sm:$0xff]
    %v96 = vld [vmem:[#allocation2 + $0x80] sm:$0xff]
    %v97 = vld [vmem:[#allocation2 + $0x88] sm:$0xff]
    %v98 = vld [vmem:[#allocation2 + $0x90] sm:$0xff]
    %v99 = vld [vmem:[#allocation2 + $0x98] sm:$0xff]
    %v100 = vld [vmem:[#allocation2 + $0xa0] sm:$0xff]
    %v101 = vld [vmem:[#allocation2 + $0xa8] sm:$0xff]
    %v102 = vld [vmem:[#allocation2 + $0xb0] sm:$0xff]
    %v103 = vld [vmem:[#allocation2 + $0xb8] sm:$0xff]
    %v104 = vld [vmem:[#allocation2 + $0xc0] sm:$0xff]
    %v105 = vld [vmem:[#allocation2 + $0xc8] sm:$0xff]
    %v106 = vld [vmem:[#allocation2 + $0xd0] sm:$0xff]
    %v107 = vld [vmem:[#allocation2 + $0xd8] sm:$0xff]
    %v108 = vld [vmem:[#allocation2 + $0xe0] sm:$0xff]
    %v109 = vld [vmem:[#allocation2 + $0xe8] sm:$0xff]
    %v110 = vld [vmem:[#allocation2 + $0xf0] sm:$0xff]
    %v111 = vld [vmem:[#allocation2 + $0xf8] sm:$0xff]
    %v112 = vld [vmem:[#allocation2 + $0x100] sm:$0xff]
    %v113 = vld [vmem:[#allocation2 + $0x108] sm:$0xff]
    %v114 = vld [vmem:[#allocation2 + $0x110] sm:$0xff]
    %v115 = vld [vmem:[#allocation2 + $0x118] sm:$0xff]
    %v116 = vld [vmem:[#allocation2 + $0x120] sm:$0xff]
    %v117 = vld [vmem:[#allocation2 + $0x128] sm:$0xff]
    %v118 = vld [vmem:[#allocation2 + $0x130] sm:$0xff]
    %v119 = vld [vmem:[#allocation2 + $0x138] sm:$0xff]
    %v120 = vld [vmem:[#allocation2 + $0x140] sm:$0xff]
    %v121 = vld [vmem:[#allocation2 + $0x148] sm:$0xff]
    %v122 = vld [vmem:[#allocation2 + $0x150] sm:$0xff]
    %v123 = vld [vmem:[#allocation2 + $0x158] sm:$0xff]
    %v124 = vld [vmem:[#allocation2 + $0x160] sm:$0xff]
    %v125 = vld [vmem:[#allocation2 + $0x168] sm:$0xff]
    %v126 = vld [vmem:[#allocation2 + $0x170] sm:$0xff]
    %v127 = vld [vmem:[#allocation2 + $0x178] sm:$0xff]
    %v128 = vld [vmem:[#allocation2 + $0x180] sm:$0xff]
    %v129 = vld [vmem:[#allocation2 + $0x188] sm:$0xff]
    %v130 = vld [vmem:[#allocation2 + $0x190] sm:$0xff]
    %v131 = vld [vmem:[#allocation2 + $0x198] sm:$0xff]
    %v132 = vld [vmem:[#allocation2 + $0x1a0] sm:$0xff]
    %v133 = vld [vmem:[#allocation2 + $0x1a8] sm:$0xff]
    %v134 = vld [vmem:[#allocation2 + $0x1b0] sm:$0xff]
    %v135 = vld [vmem:[#allocation2 + $0x1b8] sm:$0xff]
    %v136 = vld [vmem:[#allocation2 + $0x1c0] sm:$0xff]
    %v137 = vld [vmem:[#allocation2 + $0x1c8] sm:$0xff]
    %v138 = vld [vmem:[#allocation2 + $0x1d0] sm:$0xff]
    %v139 = vld [vmem:[#allocation2 + $0x1d8] sm:$0xff]
    %v140 = vld [vmem:[#allocation2 + $0x1e0] sm:$0xff]
    %v141 = vld [vmem:[#allocation2 + $0x1e8] sm:$0xff]
    %v142 = vld [vmem:[#allocation2 + $0x1f0] sm:$0xff]
    %v143 = vld [vmem:[#allocation2 + $0x1f8] sm:$0xff]
    %v144 = vld [vmem:[#allocation2 + $0x200] sm:$0xff]
    %v145 = vld [vmem:[#allocation2 + $0x208] sm:$0xff]
    %v146 = vld [vmem:[#allocation2 + $0x210] sm:$0xff]
    %v147 = vld [vmem:[#allocation2 + $0x218] sm:$0xff]
    %v148 = vld [vmem:[#allocation2 + $0x220] sm:$0xff]
    %v149 = vld [vmem:[#allocation2 + $0x228] sm:$0xff]
    %v150 = vld [vmem:[#allocation2 + $0x230] sm:$0xff]
    %v151 = vld [vmem:[#allocation2 + $0x238] sm:$0xff]
    %v152 = vld [vmem:[#allocation2 + $0x240] sm:$0xff]
    %v153 = vld [vmem:[#allocation2 + $0x248] sm:$0xff]
    %v154 = vld [vmem:[#allocation2 + $0x250] sm:$0xff]
    %v155 = vld [vmem:[#allocation2 + $0x258] sm:$0xff]
    %v156 = vld [vmem:[#allocation2 + $0x260] sm:$0xff]
    %v157 = vld [vmem:[#allocation2 + $0x268] sm:$0xff]
    %v158 = vld [vmem:[#allocation2 + $0x270] sm:$0xff]
    %v159 = vld [vmem:[#allocation2 + $0x278] sm:$0xff]
    %v160 = vld [vmem:[#allocation2 + $0x280] sm:$0xff]
    %v161 = vld [vmem:[#allocation2 + $0x288] sm:$0xff]
    %v162 = vld [vmem:[#allocation2 + $0x290] sm:$0xff]
    %v163 = vld [vmem:[#allocation2 + $0x298] sm:$0xff]
    %v164 = vld [vmem:[#allocation2 + $0x2a0] sm:$0xff]
    %v165 = vld [vmem:[#allocation2 + $0x2a8] sm:$0xff]
    %v166 = vld [vmem:[#allocation2 + $0x2b0] sm:$0xff]
    %v167 = vld [vmem:[#allocation2 + $0x2b8] sm:$0xff]
    %v168 = vld [vmem:[#allocation2 + $0x2c0] sm:$0xff]
    %v169 = vld [vmem:[#allocation2 + $0x2c8] sm:$0xff]
    %v170 = vld [vmem:[#allocation2 + $0x2d0] sm:$0xff]
    %v171 = vld [vmem:[#allocation2 + $0x2d8] sm:$0xff]
    %v172 = vld [vmem:[#allocation2 + $0x2e0] sm:$0xff]
    %v173 = vld [vmem:[#allocation2 + $0x2e8] sm:$0xff]
    %v174 = vld [vmem:[#allocation2 + $0x2f0] sm:$0xff]
    %v175 = vld [vmem:[#allocation2 + $0x2f8] sm:$0xff]
    %v176 = vld [vmem:[#allocation2 + $0x300] sm:$0xff]
    %v177 = vld [vmem:[#allocation2 + $0x308] sm:$0xff]
    %v178 = vld [vmem:[#allocation2 + $0x310] sm:$0xff]
    %v179 = vld [vmem:[#allocation2 + $0x318] sm:$0xff]
    %v180 = vld [vmem:[#allocation2 + $0x320] sm:$0xff]
    %v181 = vld [vmem:[#allocation2 + $0x328] sm:$0xff]
    %v182 = vld [vmem:[#allocation2 + $0x330] sm:$0xff]
    %v183 = vld [vmem:[#allocation2 + $0x338] sm:$0xff]
    %v184 = vld [vmem:[#allocation2 + $0x340] sm:$0xff]
    %v185 = vld [vmem:[#allocation2 + $0x348] sm:$0xff]
    %v186 = vld [vmem:[#allocation2 + $0x350] sm:$0xff]
    %v187 = vld [vmem:[#allocation2 + $0x358] sm:$0xff]
    %v188 = vld [vmem:[#allocation2 + $0x360] sm:$0xff]
    %v189 = vld [vmem:[#allocation2 + $0x368] sm:$0xff]
    %v190 = vld [vmem:[#allocation2 + $0x370] sm:$0xff]
    %v191 = vld [vmem:[#allocation2 + $0x378] sm:$0xff]
    %v192 = vld [vmem:[#allocation2 + $0x380] sm:$0xff]
    %v193 = vld [vmem:[#allocation2 + $0x388] sm:$0xff]
    %v194 = vld [vmem:[#allocation2 + $0x390] sm:$0xff]
    %v195 = vld [vmem:[#allocation2 + $0x398] sm:$0xff]
    %v196 = vld [vmem:[#allocation2 + $0x3a0] sm:$0xff]
    %v197 = vld [vmem:[#allocation2 + $0x3a8] sm:$0xff]
    %v198 = vld [vmem:[#allocation2 + $0x3b0] sm:$0xff]
    %v199 = vld [vmem:[#allocation2 + $0x3b8] sm:$0xff]
    %v200 = vld [vmem:[#allocation2 + $0x3c0] sm:$0xff]
    %v201 = vld [vmem:[#allocation2 + $0x3c8] sm:$0xff]
    %v202 = vld [vmem:[#allocation2 + $0x3d0] sm:$0xff]
    %v203 = vld [vmem:[#allocation2 + $0x3d8] sm:$0xff]
    %v204 = vld [vmem:[#allocation2 + $0x3e0] sm:$0xff]
    %v205 = vld [vmem:[#allocation2 + $0x3e8] sm:$0xff]
    %v206 = vld [vmem:[#allocation2 + $0x3f0] sm:$0xff]
    %v207 = vld [vmem:[#allocation2 + $0x3f8] sm:$0xff]
    %v208 = vld [vmem:[#allocation2 + $0x400] sm:$0xff]
    %v209 = vld [vmem:[#allocation2 + $0x408] sm:$0xff]
    %v210 = vld [vmem:[#allocation2 + $0x410] sm:$0xff]
    %v211 = vld [vmem:[#allocation2 + $0x418] sm:$0xff]
    %v212 = vld [vmem:[#allocation2 + $0x420] sm:$0xff]
    %v213 = vld [vmem:[#allocation2 + $0x428] sm:$0xff]
    %v214 = vld [vmem:[#allocation2 + $0x430] sm:$0xff]
    %v215 = vld [vmem:[#allocation2 + $0x438] sm:$0xff]
    %v216 = vld [vmem:[#allocation2 + $0x440] sm:$0xff]
    %v217 = vld [vmem:[#allocation2 + $0x448] sm:$0xff]
    %v218 = vld [vmem:[#allocation2 + $0x450] sm:$0xff]
    %v219 = vld [vmem:[#allocation2 + $0x458] sm:$0xff]
    %v220 = vld [vmem:[#allocation2 + $0x460] sm:$0xff]
    %v221 = vld [vmem:[#allocation2 + $0x468] sm:$0xff]
    %v222 = vld [vmem:[#allocation2 + $0x470] sm:$0xff]
    %v223 = vld [vmem:[#allocation2 + $0x478] sm:$0xff]
    %v224 = vld [vmem:[#allocation2 + $0x480] sm:$0xff]
    %v225 = vld [vmem:[#allocation2 + $0x488] sm:$0xff]
    %v226 = vld [vmem:[#allocation2 + $0x490] sm:$0xff]
    %v227 = vld [vmem:[#allocation2 + $0x498] sm:$0xff]
    %v228 = vld [vmem:[#allocation2 + $0x4a0] sm:$0xff]
    %v229 = vld [vmem:[#allocation2 + $0x4a8] sm:$0xff]
    %v230 = vld [vmem:[#allocation2 + $0x4b0] sm:$0xff]
    %v231 = vld [vmem:[#allocation2 + $0x4b8] sm:$0xff]
    %v232 = vld [vmem:[#allocation2 + $0x4c0] sm:$0xff]
    %v233 = vld [vmem:[#allocation2 + $0x4c8] sm:$0xff]
    %v234 = vld [vmem:[#allocation2 + $0x4d0] sm:$0xff]
    %v235 = vld [vmem:[#allocation2 + $0x4d8] sm:$0xff]
    %v236 = vld [vmem:[#allocation2 + $0x4e0] sm:$0xff]
    %v237 = vld [vmem:[#allocation2 + $0x4e8] sm:$0xff]
    %v238 = vld [vmem:[#allocation2 + $0x4f0] sm:$0xff]
    %v239 = vld [vmem:[#allocation2 + $0x4f8] sm:$0xff]
    %v240 = vld [vmem:[#allocation2 + $0x500] sm:$0xff]
    %v241 = vld [vmem:[#allocation2 + $0x508] sm:$0xff]
    %v242 = vld [vmem:[#allocation2 + $0x510] sm:$0xff]
    %v243 = vld [vmem:[#allocation2 + $0x518] sm:$0xff]
    %v244 = vld [vmem:[#allocation2 + $0x520] sm:$0xff]
    %v245 = vld [vmem:[#allocation2 + $0x528] sm:$0xff]
    %v246 = vld [vmem:[#allocation2 + $0x530] sm:$0xff]
    %v247 = vld [vmem:[#allocation2 + $0x538] sm:$0xff]
    %v248 = vld [vmem:[#allocation2 + $0x540] sm:$0xff]
    %v249 = vld [vmem:[#allocation2 + $0x548] sm:$0xff]
    %v250 = vld [vmem:[#allocation2 + $0x550] sm:$0xff]
    %v251 = vld [vmem:[#allocation2 + $0x558] sm:$0xff]
    %v252 = vld [vmem:[#allocation2 + $0x560] sm:$0xff]
    %v253 = vld [vmem:[#allocation2 + $0x568] sm:$0xff]
    %v254 = vld [vmem:[#allocation2 + $0x570] sm:$0xff]
    %v255 = vld [vmem:[#allocation2 + $0x578] sm:$0xff]
    %v256 = vld [vmem:[#allocation2 + $0x580] sm:$0xff]
    %v257 = vld [vmem:[#allocation2 + $0x588] sm:$0xff]
    %v258 = vld [vmem:[#allocation2 + $0x590] sm:$0xff]
    %v259 = vld [vmem:[#allocation2 + $0x598] sm:$0xff]
    %v260 = vld [vmem:[#allocation2 + $0x5a0] sm:$0xff]
    %v261 = vld [vmem:[#allocation2 + $0x5a8] sm:$0xff]
    %v262 = vld [vmem:[#allocation2 + $0x5b0] sm:$0xff]
    %v263 = vld [vmem:[#allocation2 + $0x5b8] sm:$0xff]
    %v264 = vld [vmem:[#allocation2 + $0x5c0] sm:$0xff]
    %v265 = vld [vmem:[#allocation2 + $0x5c8] sm:$0xff]
    %v266 = vld [vmem:[#allocation2 + $0x5d0] sm:$0xff]
    %v267 = vld [vmem:[#allocation2 + $0x5d8] sm:$0xff]
    %v268 = vld [vmem:[#allocation2 + $0x5e0] sm:$0xff]
    %v269 = vld [vmem:[#allocation2 + $0x5e8] sm:$0xff]
    %v270 = vld [vmem:[#allocation2 + $0x5f0] sm:$0xff]
    %v271 = vld [vmem:[#allocation2 + $0x5f8] sm:$0xff]
    %v272 = vld [vmem:[#allocation2 + $0x600] sm:$0xff]
    %v273 = vld [vmem:[#allocation2 + $0x608] sm:$0xff]
    %v274 = vld [vmem:[#allocation2 + $0x610] sm:$0xff]
    %v275 = vld [vmem:[#allocation2 + $0x618] sm:$0xff]
    %v276 = vld [vmem:[%s2] sm:$0xf]
    %v278 = vlaneseq
    %v279 = vshrl.u32 %v278, 7
    %v280 = vsub.s32 0, %v279
    %v281 = vrot.slane %v276, %v280
    %v282 = vlaneseq
    %v283 = vshrl.u32 %v282, 7
    %v284 = vsub.s32 1, %v283
    %v285 = vrot.slane %v276, %v284
    %v286 = vlaneseq
    %v287 = vshrl.u32 %v286, 7
    %v288 = vsub.s32 2, %v287
    %v289 = vrot.slane %v276, %v288
    %v290 = vlaneseq
    %v291 = vshrl.u32 %v290, 7
    %v292 = vsub.s32 3, %v291
    %v293 = vrot.slane %v276, %v292
    %v494 = vunpack.c.l.b16 %v80
    %v495 = vunpack.c.h.b16 %v80
    %v496 = vunpack.c.l.b16 %v81
    %v497 = vunpack.c.h.b16 %v81
    %v498 = vunpack.c.l.b16 %v82
    %v499 = vunpack.c.h.b16 %v82
    %v500 = vunpack.c.l.b16 %v83
    %v501 = vunpack.c.h.b16 %v83
    %v502 = vunpack.c.l.b16 %v84
    %v503 = vunpack.c.h.b16 %v84
    %v504 = vunpack.c.l.b16 %v85
    %v505 = vunpack.c.h.b16 %v85
    %v506 = vunpack.c.l.b16 %v86
    %v507 = vunpack.c.h.b16 %v86
    %v508 = vunpack.c.l.b16 %v87
    %v509 = vunpack.c.h.b16 %v87
    %v510 = vunpack.c.l.b16 %v88
    %v511 = vunpack.c.h.b16 %v88
    %v512 = vunpack.c.l.b16 %v89
    %v513 = vunpack.c.h.b16 %v89
    %v514 = vunpack.c.l.b16 %v90
    %v515 = vunpack.c.h.b16 %v90
    %v516 = vunpack.c.l.b16 %v91
    %v517 = vunpack.c.h.b16 %v91
    %v518 = vunpack.c.l.b16 %v92
    %v519 = vunpack.c.h.b16 %v92
    %v520 = vunpack.c.l.b16 %v93
    %v521 = vunpack.c.h.b16 %v93
    %v522 = vunpack.c.l.b16 %v94
    %v523 = vunpack.c.h.b16 %v94
    %v524 = vunpack.c.l.b16 %v95
    %v525 = vunpack.c.h.b16 %v95
    %v526 = vunpack.c.l.b16 %v96
    %v527 = vunpack.c.h.b16 %v96
    %v528 = vunpack.c.l.b16 %v97
    %v529 = vunpack.c.h.b16 %v97
    %v530 = vunpack.c.l.b16 %v98
    %v531 = vunpack.c.h.b16 %v98
    %v532 = vunpack.c.l.b16 %v99
    %v533 = vunpack.c.h.b16 %v99
    %v534 = vunpack.c.l.b16 %v100
    %v535 = vunpack.c.h.b16 %v100
    %v536 = vunpack.c.l.b16 %v101
    %v537 = vunpack.c.h.b16 %v101
    %v538 = vunpack.c.l.b16 %v102
    %v539 = vunpack.c.h.b16 %v102
    %v540 = vunpack.c.l.b16 %v103
    %v541 = vunpack.c.h.b16 %v103
    %v542 = vunpack.c.l.b16 %v104
    %v543 = vunpack.c.h.b16 %v104
    %v544 = vunpack.c.l.b16 %v105
    %v545 = vunpack.c.h.b16 %v105
    %v546 = vunpack.c.l.b16 %v106
    %v547 = vunpack.c.h.b16 %v106
    %v548 = vunpack.c.l.b16 %v107
    %v549 = vunpack.c.h.b16 %v107
    %v550 = vunpack.c.l.b16 %v108
    %v551 = vunpack.c.h.b16 %v108
    %v552 = vunpack.c.l.b16 %v109
    %v553 = vunpack.c.h.b16 %v109
    %v554 = vunpack.c.l.b16 %v110
    %v555 = vunpack.c.h.b16 %v110
    %v556 = vunpack.c.l.b16 %v111
    %v557 = vunpack.c.h.b16 %v111
    %v558 = vunpack.c.l.b16 %v112
    %v559 = vunpack.c.h.b16 %v112
    %v560 = vunpack.c.l.b16 %v113
    %v561 = vunpack.c.h.b16 %v113
    %v562 = vunpack.c.l.b16 %v114
    %v563 = vunpack.c.h.b16 %v114
    %v564 = vunpack.c.l.b16 %v115
    %v565 = vunpack.c.h.b16 %v115
    %v566 = vunpack.c.l.b16 %v116
    %v567 = vunpack.c.h.b16 %v116
    %v568 = vunpack.c.l.b16 %v117
    %v569 = vunpack.c.h.b16 %v117
    %v570 = vunpack.c.l.b16 %v118
    %v571 = vunpack.c.h.b16 %v118
    %v572 = vunpack.c.l.b16 %v119
    %v573 = vunpack.c.h.b16 %v119
    %v574 = vunpack.c.l.b16 %v120
    %v575 = vunpack.c.h.b16 %v120
    %v576 = vunpack.c.l.b16 %v121
    %v577 = vunpack.c.h.b16 %v121
    %v578 = vunpack.c.l.b16 %v122
    %v579 = vunpack.c.h.b16 %v122
    %v580 = vunpack.c.l.b16 %v123
    %v581 = vunpack.c.h.b16 %v123
    %v582 = vunpack.c.l.b16 %v124
    %v583 = vunpack.c.h.b16 %v124
    %v584 = vunpack.c.l.b16 %v125
    %v585 = vunpack.c.h.b16 %v125
    %v586 = vunpack.c.l.b16 %v126
    %v587 = vunpack.c.h.b16 %v126
    %v588 = vunpack.c.l.b16 %v127
    %v589 = vunpack.c.h.b16 %v127
    %v590 = vunpack.c.l.b16 %v128
    %v591 = vunpack.c.h.b16 %v128
    %v592 = vunpack.c.l.b16 %v129
    %v593 = vunpack.c.h.b16 %v129
    %v594 = vunpack.c.l.b16 %v130
    %v595 = vunpack.c.h.b16 %v130
    %v596 = vunpack.c.l.b16 %v131
    %v597 = vunpack.c.h.b16 %v131
    %v598 = vunpack.c.l.b16 %v132
    %v599 = vunpack.c.h.b16 %v132
    %v600 = vunpack.c.l.b16 %v133
    %v601 = vunpack.c.h.b16 %v133
    %v602 = vunpack.c.l.b16 %v134
    %v603 = vunpack.c.h.b16 %v134
    %v604 = vunpack.c.l.b16 %v135
    %v605 = vunpack.c.h.b16 %v135
    %v606 = vunpack.c.l.b16 %v136
    %v607 = vunpack.c.h.b16 %v136
    %v608 = vunpack.c.l.b16 %v137
    %v609 = vunpack.c.h.b16 %v137
    %v610 = vunpack.c.l.b16 %v138
    %v611 = vunpack.c.h.b16 %v138
    %v612 = vunpack.c.l.b16 %v139
    %v613 = vunpack.c.h.b16 %v139
    %v614 = vunpack.c.l.b16 %v140
    %v615 = vunpack.c.h.b16 %v140
    %v616 = vunpack.c.l.b16 %v141
    %v617 = vunpack.c.h.b16 %v141
    %v618 = vunpack.c.l.b16 %v142
    %v619 = vunpack.c.h.b16 %v142
    %v620 = vunpack.c.l.b16 %v143
    %v621 = vunpack.c.h.b16 %v143
    %v622 = vunpack.c.l.b16 %v144
    %v623 = vunpack.c.h.b16 %v144
    %v624 = vunpack.c.l.b16 %v145
    %v625 = vunpack.c.h.b16 %v145
    %v626 = vunpack.c.l.b16 %v146
    %v627 = vunpack.c.h.b16 %v146
    %v628 = vunpack.c.l.b16 %v147
    %v629 = vunpack.c.h.b16 %v147
    %v630 = vunpack.c.l.b16 %v148
    %v631 = vunpack.c.h.b16 %v148
    %v632 = vunpack.c.l.b16 %v149
    %v633 = vunpack.c.h.b16 %v149
    %v634 = vunpack.c.l.b16 %v150
    %v635 = vunpack.c.h.b16 %v150
    %v636 = vunpack.c.l.b16 %v151
    %v637 = vunpack.c.h.b16 %v151
    %v638 = vunpack.c.l.b16 %v152
    %v639 = vunpack.c.h.b16 %v152
    %v640 = vunpack.c.l.b16 %v153
    %v641 = vunpack.c.h.b16 %v153
    %v642 = vunpack.c.l.b16 %v154
    %v643 = vunpack.c.h.b16 %v154
    %v644 = vunpack.c.l.b16 %v155
    %v645 = vunpack.c.h.b16 %v155
    %v646 = vunpack.c.l.b16 %v156
    %v647 = vunpack.c.h.b16 %v156
    %v648 = vunpack.c.l.b16 %v157
    %v649 = vunpack.c.h.b16 %v157
    %v650 = vunpack.c.l.b16 %v158
    %v651 = vunpack.c.h.b16 %v158
    %v652 = vunpack.c.l.b16 %v159
    %v653 = vunpack.c.h.b16 %v159
    %v654 = vunpack.c.l.b16 %v160
    %v655 = vunpack.c.h.b16 %v160
    %v656 = vunpack.c.l.b16 %v161
    %v657 = vunpack.c.h.b16 %v161
    %v658 = vunpack.c.l.b16 %v162
    %v659 = vunpack.c.h.b16 %v162
    %v660 = vunpack.c.l.b16 %v163
    %v661 = vunpack.c.h.b16 %v163
    %v662 = vunpack.c.l.b16 %v164
    %v663 = vunpack.c.h.b16 %v164
    %v664 = vunpack.c.l.b16 %v165
    %v665 = vunpack.c.h.b16 %v165
    %v666 = vunpack.c.l.b16 %v166
    %v667 = vunpack.c.h.b16 %v166
    %v668 = vunpack.c.l.b16 %v167
    %v669 = vunpack.c.h.b16 %v167
    %v670 = vunpack.c.l.b16 %v168
    %v671 = vunpack.c.h.b16 %v168
    %v672 = vunpack.c.l.b16 %v169
    %v673 = vunpack.c.h.b16 %v169
    %v674 = vunpack.c.l.b16 %v170
    %v675 = vunpack.c.h.b16 %v170
    %v676 = vunpack.c.l.b16 %v171
    %v677 = vunpack.c.h.b16 %v171
    %v678 = vunpack.c.l.b16 %v172
    %v679 = vunpack.c.h.b16 %v172
    %v680 = vunpack.c.l.b16 %v173
    %v681 = vunpack.c.h.b16 %v173
    %v682 = vunpack.c.l.b16 %v174
    %v683 = vunpack.c.h.b16 %v174
    %v684 = vunpack.c.l.b16 %v175
    %v685 = vunpack.c.h.b16 %v175
    %v686 = vunpack.c.l.b16 %v176
    %v687 = vunpack.c.h.b16 %v176
    %v688 = vunpack.c.l.b16 %v177
    %v689 = vunpack.c.h.b16 %v177
    %v690 = vunpack.c.l.b16 %v178
    %v691 = vunpack.c.h.b16 %v178
    %v692 = vunpack.c.l.b16 %v179
    %v693 = vunpack.c.h.b16 %v179
    %v694 = vunpack.c.l.b16 %v180
    %v695 = vunpack.c.h.b16 %v180
    %v696 = vunpack.c.l.b16 %v181
    %v697 = vunpack.c.h.b16 %v181
    %v698 = vunpack.c.l.b16 %v182
    %v699 = vunpack.c.h.b16 %v182
    %v700 = vunpack.c.l.b16 %v183
    %v701 = vunpack.c.h.b16 %v183
    %v702 = vunpack.c.l.b16 %v184
    %v703 = vunpack.c.h.b16 %v184
    %v704 = vunpack.c.l.b16 %v185
    %v705 = vunpack.c.h.b16 %v185
    %v706 = vunpack.c.l.b16 %v186
    %v707 = vunpack.c.h.b16 %v186
    %v708 = vunpack.c.l.b16 %v187
    %v709 = vunpack.c.h.b16 %v187
    %v710 = vunpack.c.l.b16 %v188
    %v711 = vunpack.c.h.b16 %v188
    %v712 = vunpack.c.l.b16 %v189
    %v713 = vunpack.c.h.b16 %v189
    %v714 = vunpack.c.l.b16 %v190
    %v715 = vunpack.c.h.b16 %v190
    %v716 = vunpack.c.l.b16 %v191
    %v717 = vunpack.c.h.b16 %v191
    %v718 = vunpack.c.l.b16 %v192
    %v719 = vunpack.c.h.b16 %v192
    %v720 = vunpack.c.l.b16 %v193
    %v721 = vunpack.c.h.b16 %v193
    %v722 = vunpack.c.l.b16 %v194
    %v723 = vunpack.c.h.b16 %v194
    %v724 = vunpack.c.l.b16 %v195
    %v725 = vunpack.c.h.b16 %v195
    %v726 = vunpack.c.l.b16 %v196
    %v727 = vunpack.c.h.b16 %v196
    %v728 = vunpack.c.l.b16 %v197
    %v729 = vunpack.c.h.b16 %v197
    %v730 = vunpack.c.l.b16 %v198
    %v731 = vunpack.c.h.b16 %v198
    %v732 = vunpack.c.l.b16 %v199
    %v733 = vunpack.c.h.b16 %v199
    %v734 = vunpack.c.l.b16 %v200
    %v735 = vunpack.c.h.b16 %v200
    %v736 = vunpack.c.l.b16 %v201
    %v737 = vunpack.c.h.b16 %v201
    %v738 = vunpack.c.l.b16 %v202
    %v739 = vunpack.c.h.b16 %v202
    %v740 = vunpack.c.l.b16 %v203
    %v741 = vunpack.c.h.b16 %v203
    %v742 = vunpack.c.l.b16 %v204
    %v743 = vunpack.c.h.b16 %v204
    %v744 = vunpack.c.l.b16 %v205
    %v745 = vunpack.c.h.b16 %v205
    %v746 = vunpack.c.l.b16 %v206
    %v747 = vunpack.c.h.b16 %v206
    %v748 = vunpack.c.l.b16 %v207
    %v749 = vunpack.c.h.b16 %v207
    %v750 = vunpack.c.l.b16 %v208
    %v751 = vunpack.c.h.b16 %v208
    %v752 = vunpack.c.l.b16 %v209
    %v753 = vunpack.c.h.b16 %v209
    %v754 = vunpack.c.l.b16 %v210
    %v755 = vunpack.c.h.b16 %v210
    %v756 = vunpack.c.l.b16 %v211
    %v757 = vunpack.c.h.b16 %v211
    %v758 = vunpack.c.l.b16 %v212
    %v759 = vunpack.c.h.b16 %v212
    %v760 = vunpack.c.l.b16 %v213
    %v761 = vunpack.c.h.b16 %v213
    %v762 = vunpack.c.l.b16 %v214
    %v763 = vunpack.c.h.b16 %v214
    %v764 = vunpack.c.l.b16 %v215
    %v765 = vunpack.c.h.b16 %v215
    %v766 = vunpack.c.l.b16 %v216
    %v767 = vunpack.c.h.b16 %v216
    %v768 = vunpack.c.l.b16 %v217
    %v769 = vunpack.c.h.b16 %v217
    %v770 = vunpack.c.l.b16 %v218
    %v771 = vunpack.c.h.b16 %v218
    %v772 = vunpack.c.l.b16 %v219
    %v773 = vunpack.c.h.b16 %v219
    %v774 = vunpack.c.l.b16 %v220
    %v775 = vunpack.c.h.b16 %v220
    %v776 = vunpack.c.l.b16 %v221
    %v777 = vunpack.c.h.b16 %v221
    %v778 = vunpack.c.l.b16 %v222
    %v779 = vunpack.c.h.b16 %v222
    %v780 = vunpack.c.l.b16 %v223
    %v781 = vunpack.c.h.b16 %v223
    %v782 = vunpack.c.l.b16 %v224
    %v783 = vunpack.c.h.b16 %v224
    %v784 = vunpack.c.l.b16 %v225
    %v785 = vunpack.c.h.b16 %v225
    %v786 = vunpack.c.l.b16 %v226
    %v787 = vunpack.c.h.b16 %v226
    %v788 = vunpack.c.l.b16 %v227
    %v789 = vunpack.c.h.b16 %v227
    %v790 = vunpack.c.l.b16 %v228
    %v791 = vunpack.c.h.b16 %v228
    %v792 = vunpack.c.l.b16 %v229
    %v793 = vunpack.c.h.b16 %v229
    %v794 = vunpack.c.l.b16 %v230
    %v795 = vunpack.c.h.b16 %v230
    %v796 = vunpack.c.l.b16 %v231
    %v797 = vunpack.c.h.b16 %v231
    %v798 = vunpack.c.l.b16 %v232
    %v799 = vunpack.c.h.b16 %v232
    %v800 = vunpack.c.l.b16 %v233
    %v801 = vunpack.c.h.b16 %v233
    %v802 = vunpack.c.l.b16 %v234
    %v803 = vunpack.c.h.b16 %v234
    %v804 = vunpack.c.l.b16 %v235
    %v805 = vunpack.c.h.b16 %v235
    %v806 = vunpack.c.l.b16 %v236
    %v807 = vunpack.c.h.b16 %v236
    %v808 = vunpack.c.l.b16 %v237
    %v809 = vunpack.c.h.b16 %v237
    %v810 = vunpack.c.l.b16 %v238
    %v811 = vunpack.c.h.b16 %v238
    %v812 = vunpack.c.l.b16 %v239
    %v813 = vunpack.c.h.b16 %v239
    %v814 = vunpack.c.l.b16 %v240
    %v815 = vunpack.c.h.b16 %v240
    %v816 = vunpack.c.l.b16 %v241
    %v817 = vunpack.c.h.b16 %v241
    %v818 = vunpack.c.l.b16 %v242
    %v819 = vunpack.c.h.b16 %v242
    %v820 = vunpack.c.l.b16 %v243
    %v821 = vunpack.c.h.b16 %v243
    %v822 = vunpack.c.l.b16 %v244
    %v823 = vunpack.c.h.b16 %v244
    %v824 = vunpack.c.l.b16 %v245
    %v825 = vunpack.c.h.b16 %v245
    %v826 = vunpack.c.l.b16 %v246
    %v827 = vunpack.c.h.b16 %v246
    %v828 = vunpack.c.l.b16 %v247
    %v829 = vunpack.c.h.b16 %v247
    %v830 = vunpack.c.l.b16 %v248
    %v831 = vunpack.c.h.b16 %v248
    %v832 = vunpack.c.l.b16 %v249
    %v833 = vunpack.c.h.b16 %v249
    %v834 = vunpack.c.l.b16 %v250
    %v835 = vunpack.c.h.b16 %v250
    %v836 = vunpack.c.l.b16 %v251
    %v837 = vunpack.c.h.b16 %v251
    %v838 = vunpack.c.l.b16 %v252
    %v839 = vunpack.c.h.b16 %v252
    %v840 = vunpack.c.l.b16 %v253
    %v841 = vunpack.c.h.b16 %v253
    %v842 = vunpack.c.l.b16 %v254
    %v843 = vunpack.c.h.b16 %v254
    %v844 = vunpack.c.l.b16 %v255
    %v845 = vunpack.c.h.b16 %v255
    %v846 = vunpack.c.l.b16 %v256
    %v847 = vunpack.c.h.b16 %v256
    %v848 = vunpack.c.l.b16 %v257
    %v849 = vunpack.c.h.b16 %v257
    %v850 = vunpack.c.l.b16 %v258
    %v851 = vunpack.c.h.b16 %v258
    %v852 = vunpack.c.l.b16 %v259
    %v853 = vunpack.c.h.b16 %v259
    %v854 = vunpack.c.l.b16 %v260
    %v855 = vunpack.c.h.b16 %v260
    %v856 = vunpack.c.l.b16 %v261
    %v857 = vunpack.c.h.b16 %v261
    %v858 = vunpack.c.l.b16 %v262
    %v859 = vunpack.c.h.b16 %v262
    %v860 = vunpack.c.l.b16 %v263
    %v861 = vunpack.c.h.b16 %v263
    %v862 = vunpack.c.l.b16 %v264
    %v863 = vunpack.c.h.b16 %v264
    %v864 = vunpack.c.l.b16 %v265
    %v865 = vunpack.c.h.b16 %v265
    %v866 = vunpack.c.l.b16 %v266
    %v867 = vunpack.c.h.b16 %v266
    %v868 = vunpack.c.l.b16 %v267
    %v869 = vunpack.c.h.b16 %v267
    %v870 = vunpack.c.l.b16 %v268
    %v871 = vunpack.c.h.b16 %v268
    %v872 = vunpack.c.l.b16 %v269
    %v873 = vunpack.c.h.b16 %v269
    %v874 = vunpack.c.l.b16 %v270
    %v875 = vunpack.c.h.b16 %v270
    %v876 = vunpack.c.l.b16 %v271
    %v877 = vunpack.c.h.b16 %v271
    %v878 = vunpack.c.l.b16 %v272
    %v879 = vunpack.c.h.b16 %v272
    %v880 = vunpack.c.l.b16 %v273
    %v881 = vunpack.c.h.b16 %v273
    %v882 = vunpack.c.l.b16 %v274
    %v883 = vunpack.c.h.b16 %v274
    %v884 = vunpack.c.l.b16 %v275
    %v885 = vunpack.c.h.b16 %v275
    %v886 = vpack.c.b16 %v498, %v494
    %v887 = vpack.c.b16 %v499, %v495
    %v888 = vpack.c.b16 %v500, %v496
    %v889 = vpack.c.b16 %v501, %v497
    %v890 = vpack.c.b16 %v506, %v502
    %v891 = vpack.c.b16 %v507, %v503
    %v892 = vpack.c.b16 %v508, %v504
    %v893 = vpack.c.b16 %v509, %v505
    %v894 = vpack.c.b16 %v514, %v510
    %v895 = vpack.c.b16 %v515, %v511
    %v896 = vpack.c.b16 %v516, %v512
    %v897 = vpack.c.b16 %v517, %v513
    %v898 = vpack.c.b16 %v522, %v518
    %v899 = vpack.c.b16 %v523, %v519
    %v900 = vpack.c.b16 %v524, %v520
    %v901 = vpack.c.b16 %v525, %v521
    %v902 = vpack.c.b16 %v530, %v526
    %v903 = vpack.c.b16 %v531, %v527
    %v904 = vpack.c.b16 %v532, %v528
    %v905 = vpack.c.b16 %v533, %v529
    %v906 = vpack.c.b16 %v538, %v534
    %v907 = vpack.c.b16 %v539, %v535
    %v908 = vpack.c.b16 %v540, %v536
    %v909 = vpack.c.b16 %v541, %v537
    %v910 = vpack.c.b16 %v546, %v542
    %v911 = vpack.c.b16 %v547, %v543
    %v912 = vpack.c.b16 %v548, %v544
    %v913 = vpack.c.b16 %v549, %v545
    %v914 = vpack.c.b16 %v554, %v550
    %v915 = vpack.c.b16 %v555, %v551
    %v916 = vpack.c.b16 %v556, %v552
    %v917 = vpack.c.b16 %v557, %v553
    %v918 = vpack.c.b16 %v562, %v558
    %v919 = vpack.c.b16 %v563, %v559
    %v920 = vpack.c.b16 %v564, %v560
    %v921 = vpack.c.b16 %v565, %v561
    %v922 = vpack.c.b16 %v570, %v566
    %v923 = vpack.c.b16 %v571, %v567
    %v924 = vpack.c.b16 %v572, %v568
    %v925 = vpack.c.b16 %v573, %v569
    %v926 = vpack.c.b16 %v578, %v574
    %v927 = vpack.c.b16 %v579, %v575
    %v928 = vpack.c.b16 %v580, %v576
    %v929 = vpack.c.b16 %v581, %v577
    %v930 = vpack.c.b16 %v586, %v582
    %v931 = vpack.c.b16 %v587, %v583
    %v932 = vpack.c.b16 %v588, %v584
    %v933 = vpack.c.b16 %v589, %v585
    %v934 = vpack.c.b16 %v594, %v590
    %v935 = vpack.c.b16 %v595, %v591
    %v936 = vpack.c.b16 %v596, %v592
    %v937 = vpack.c.b16 %v597, %v593
    %v938 = vpack.c.b16 %v602, %v598
    %v939 = vpack.c.b16 %v603, %v599
    %v940 = vpack.c.b16 %v604, %v600
    %v941 = vpack.c.b16 %v605, %v601
    %v942 = vpack.c.b16 %v610, %v606
    %v943 = vpack.c.b16 %v611, %v607
    %v944 = vpack.c.b16 %v612, %v608
    %v945 = vpack.c.b16 %v613, %v609
    %v946 = vpack.c.b16 %v618, %v614
    %v947 = vpack.c.b16 %v619, %v615
    %v948 = vpack.c.b16 %v620, %v616
    %v949 = vpack.c.b16 %v621, %v617
    %v950 = vpack.c.b16 %v626, %v622
    %v951 = vpack.c.b16 %v627, %v623
    %v952 = vpack.c.b16 %v628, %v624
    %v953 = vpack.c.b16 %v629, %v625
    %v954 = vpack.c.b16 %v634, %v630
    %v955 = vpack.c.b16 %v635, %v631
    %v956 = vpack.c.b16 %v636, %v632
    %v957 = vpack.c.b16 %v637, %v633
    %v958 = vpack.c.b16 %v642, %v638
    %v959 = vpack.c.b16 %v643, %v639
    %v960 = vpack.c.b16 %v644, %v640
    %v961 = vpack.c.b16 %v645, %v641
    %v962 = vpack.c.b16 %v650, %v646
    %v963 = vpack.c.b16 %v651, %v647
    %v964 = vpack.c.b16 %v652, %v648
    %v965 = vpack.c.b16 %v653, %v649
    %v966 = vpack.c.b16 %v658, %v654
    %v967 = vpack.c.b16 %v659, %v655
    %v968 = vpack.c.b16 %v660, %v656
    %v969 = vpack.c.b16 %v661, %v657
    %v970 = vpack.c.b16 %v666, %v662
    %v971 = vpack.c.b16 %v667, %v663
    %v972 = vpack.c.b16 %v668, %v664
    %v973 = vpack.c.b16 %v669, %v665
    %v974 = vpack.c.b16 %v674, %v670
    %v975 = vpack.c.b16 %v675, %v671
    %v976 = vpack.c.b16 %v676, %v672
    %v977 = vpack.c.b16 %v677, %v673
    %v978 = vpack.c.b16 %v682, %v678
    %v979 = vpack.c.b16 %v683, %v679
    %v980 = vpack.c.b16 %v684, %v680
    %v981 = vpack.c.b16 %v685, %v681
    %v982 = vpack.c.b16 %v690, %v686
    %v983 = vpack.c.b16 %v691, %v687
    %v984 = vpack.c.b16 %v692, %v688
    %v985 = vpack.c.b16 %v693, %v689
    %v986 = vpack.c.b16 %v698, %v694
    %v987 = vpack.c.b16 %v699, %v695
    %v988 = vpack.c.b16 %v700, %v696
    %v989 = vpack.c.b16 %v701, %v697
    %v990 = vpack.c.b16 %v706, %v702
    %v991 = vpack.c.b16 %v707, %v703
    %v992 = vpack.c.b16 %v708, %v704
    %v993 = vpack.c.b16 %v709, %v705
    %v994 = vpack.c.b16 %v714, %v710
    %v995 = vpack.c.b16 %v715, %v711
    %v996 = vpack.c.b16 %v716, %v712
    %v997 = vpack.c.b16 %v717, %v713
    %v998 = vpack.c.b16 %v722, %v718
    %v999 = vpack.c.b16 %v723, %v719
    %v1000 = vpack.c.b16 %v724, %v720
    %v1001 = vpack.c.b16 %v725, %v721
    %v1002 = vpack.c.b16 %v730, %v726
    %v1003 = vpack.c.b16 %v731, %v727
    %v1004 = vpack.c.b16 %v732, %v728
    %v1005 = vpack.c.b16 %v733, %v729
    %v1006 = vpack.c.b16 %v738, %v734
    %v1007 = vpack.c.b16 %v739, %v735
    %v1008 = vpack.c.b16 %v740, %v736
    %v1009 = vpack.c.b16 %v741, %v737
    %v1010 = vpack.c.b16 %v746, %v742
    %v1011 = vpack.c.b16 %v747, %v743
    %v1012 = vpack.c.b16 %v748, %v744
    %v1013 = vpack.c.b16 %v749, %v745
    %v1014 = vpack.c.b16 %v754, %v750
    %v1015 = vpack.c.b16 %v755, %v751
    %v1016 = vpack.c.b16 %v756, %v752
    %v1017 = vpack.c.b16 %v757, %v753
    %v1018 = vpack.c.b16 %v762, %v758
    %v1019 = vpack.c.b16 %v763, %v759
    %v1020 = vpack.c.b16 %v764, %v760
    %v1021 = vpack.c.b16 %v765, %v761
    %v1022 = vpack.c.b16 %v770, %v766
    %v1023 = vpack.c.b16 %v771, %v767
    %v1024 = vpack.c.b16 %v772, %v768
    %v1025 = vpack.c.b16 %v773, %v769
    %v1026 = vpack.c.b16 %v778, %v774
    %v1027 = vpack.c.b16 %v779, %v775
    %v1028 = vpack.c.b16 %v780, %v776
    %v1029 = vpack.c.b16 %v781, %v777
    %v1030 = vpack.c.b16 %v786, %v782
    %v1031 = vpack.c.b16 %v787, %v783
    %v1032 = vpack.c.b16 %v788, %v784
    %v1033 = vpack.c.b16 %v789, %v785
    %v1034 = vpack.c.b16 %v794, %v790
    %v1035 = vpack.c.b16 %v795, %v791
    %v1036 = vpack.c.b16 %v796, %v792
    %v1037 = vpack.c.b16 %v797, %v793
    %v1038 = vpack.c.b16 %v802, %v798
    %v1039 = vpack.c.b16 %v803, %v799
    %v1040 = vpack.c.b16 %v804, %v800
    %v1041 = vpack.c.b16 %v805, %v801
    %v1042 = vpack.c.b16 %v810, %v806
    %v1043 = vpack.c.b16 %v811, %v807
    %v1044 = vpack.c.b16 %v812, %v808
    %v1045 = vpack.c.b16 %v813, %v809
    %v1046 = vpack.c.b16 %v818, %v814
    %v1047 = vpack.c.b16 %v819, %v815
    %v1048 = vpack.c.b16 %v820, %v816
    %v1049 = vpack.c.b16 %v821, %v817
    %v1050 = vpack.c.b16 %v826, %v822
    %v1051 = vpack.c.b16 %v827, %v823
    %v1052 = vpack.c.b16 %v828, %v824
    %v1053 = vpack.c.b16 %v829, %v825
    %v1054 = vpack.c.b16 %v834, %v830
    %v1055 = vpack.c.b16 %v835, %v831
    %v1056 = vpack.c.b16 %v836, %v832
    %v1057 = vpack.c.b16 %v837, %v833
    %v1058 = vpack.c.b16 %v842, %v838
    %v1059 = vpack.c.b16 %v843, %v839
    %v1060 = vpack.c.b16 %v844, %v840
    %v1061 = vpack.c.b16 %v845, %v841
    %v1062 = vpack.c.b16 %v850, %v846
    %v1063 = vpack.c.b16 %v851, %v847
    %v1064 = vpack.c.b16 %v852, %v848
    %v1065 = vpack.c.b16 %v853, %v849
    %v1066 = vpack.c.b16 %v858, %v854
    %v1067 = vpack.c.b16 %v859, %v855
    %v1068 = vpack.c.b16 %v860, %v856
    %v1069 = vpack.c.b16 %v861, %v857
    %v1070 = vpack.c.b16 %v866, %v862
    %v1071 = vpack.c.b16 %v867, %v863
    %v1072 = vpack.c.b16 %v868, %v864
    %v1073 = vpack.c.b16 %v869, %v865
    %v1074 = vpack.c.b16 %v874, %v870
    %v1075 = vpack.c.b16 %v875, %v871
    %v1076 = vpack.c.b16 %v876, %v872
    %v1077 = vpack.c.b16 %v877, %v873
    %v1078 = vpack.c.b16 %v882, %v878
    %v1079 = vpack.c.b16 %v883, %v879
    %v1080 = vpack.c.b16 %v884, %v880
    %v1081 = vpack.c.b16 %v885, %v881
    %vm1278 = vcmask 130048
    %v1280 = vsel %vm1278, %v79, 0
    %1282 = vmatprep.subr.bf16.mxu0 %v887
    %1283 = vmatpush1.bf16.msra.mxu0 %v886
    %1284 = vmatprep.subr.bf16.mxu0 %v891
    %1285 = vmatpush1.bf16.msra.mxu0 %v890
    %1286 = vmatprep.subr.bf16.mxu0 %v895
    %1287 = vmatpush1.bf16.msra.mxu0 %v894
    %1288 = vmatprep.subr.bf16.mxu0 %v899
    %1289 = vmatpush1.bf16.msra.mxu0 %v898
    %1290 = vmatprep.subr.bf16.mxu0 %v903
    %1291 = vmatpush1.bf16.msra.mxu0 %v902
    %1292 = vmatprep.subr.bf16.mxu0 %v907
    %1293 = vmatpush1.bf16.msra.mxu0 %v906
    %1294 = vmatprep.subr.bf16.mxu0 %v911
    %1295 = vmatpush1.bf16.msra.mxu0 %v910
    %1296 = vmatprep.subr.bf16.mxu0 %v915
    %1297 = vmatpush1.bf16.msra.mxu0 %v914
    %1298 = vmatprep.subr.bf16.mxu0 %v919
    %1299 = vmatpush1.bf16.msra.mxu0 %v918
    %1300 = vmatprep.subr.bf16.mxu0 %v923
    %1301 = vmatpush1.bf16.msra.mxu0 %v922
    %1302 = vmatprep.subr.bf16.mxu0 %v927
    %1303 = vmatpush1.bf16.msra.mxu0 %v926
    %1304 = vmatprep.subr.bf16.mxu0 %v931
    %1305 = vmatpush1.bf16.msra.mxu0 %v930
    %1306 = vmatprep.subr.bf16.mxu0 %v935
    %1307 = vmatpush1.bf16.msra.mxu0 %v934
    %1308 = vmatprep.subr.bf16.mxu0 %v939
    %1309 = vmatpush1.bf16.msra.mxu0 %v938
    %1310 = vmatprep.subr.bf16.mxu0 %v943
    %1311 = vmatpush1.bf16.msra.mxu0 %v942
    %1312 = vmatprep.subr.bf16.mxu0 %v947
    %1313 = vmatpush1.bf16.msra.mxu0 %v946
    %1314 = vmatprep.mubr.bf16.mxu0 %v74
    %1315 = vmatmul.mubr.bf16.gmra.mrb[0].mxu0 %v73
    %v1316 = vpop.f32.mrb[0].mxu0
    %v1317 = vadd.f32 %v281, %v1316
    %v1318 = vpop.f32.mrb[0].mxu0
    %v1319 = vadd.f32 %v285, %v1318
    %v1320 = vpop.f32.mrb[0].mxu0
    %v1321 = vadd.f32 %v281, %v1320
    %v1322 = vpop.f32.mrb[0].mxu0
    %v1323 = vadd.f32 %v285, %v1322
    %1324 = vdwg.mxu0
    %1325 = vmatprep.subr.bf16.mxu0 %v951
    %1326 = vmatpush1.bf16.msra.mxu0 %v950
    %1327 = vmatprep.subr.bf16.mxu0 %v955
    %1328 = vmatpush1.bf16.msra.mxu0 %v954
    %1329 = vmatprep.subr.bf16.mxu0 %v959
    %1330 = vmatpush1.bf16.msra.mxu0 %v958
    %1331 = vmatprep.subr.bf16.mxu0 %v963
    %1332 = vmatpush1.bf16.msra.mxu0 %v962
    %1333 = vmatprep.subr.bf16.mxu0 %v967
    %1334 = vmatpush1.bf16.msra.mxu0 %v966
    %1335 = vmatprep.subr.bf16.mxu0 %v971
    %1336 = vmatpush1.bf16.msra.mxu0 %v970
    %1337 = vmatprep.subr.bf16.mxu0 %v975
    %1338 = vmatpush1.bf16.msra.mxu0 %v974
    %1339 = vmatprep.subr.bf16.mxu0 %v979
    %1340 = vmatpush1.bf16.msra.mxu0 %v978
    %1341 = vmatprep.subr.bf16.mxu0 %v983
    %1342 = vmatpush1.bf16.msra.mxu0 %v982
    %1343 = vmatprep.subr.bf16.mxu0 %v987
    %1344 = vmatpush1.bf16.msra.mxu0 %v986
    %1345 = vmatprep.subr.bf16.mxu0 %v991
    %1346 = vmatpush1.bf16.msra.mxu0 %v990
    %1347 = vmatprep.subr.bf16.mxu0 %v995
    %1348 = vmatpush1.bf16.msra.mxu0 %v994
    %1349 = vmatprep.subr.bf16.mxu0 %v999
    %1350 = vmatpush1.bf16.msra.mxu0 %v998
    %1351 = vmatprep.subr.bf16.mxu0 %v1003
    %1352 = vmatpush1.bf16.msra.mxu0 %v1002
    %1353 = vmatprep.subr.bf16.mxu0 %v1007
    %1354 = vmatpush1.bf16.msra.mxu0 %v1006
    %1355 = vmatprep.subr.bf16.mxu0 %v1011
    %1356 = vmatpush1.bf16.msra.mxu0 %v1010
    %1357 = vmatprep.mubr.bf16.mxu0 %v76
    %1358 = vmatmul.mubr.bf16.gmra.mrb[0].mxu0 %v75
    %v1359 = vpop.f32.mrb[0].mxu0
    %v1360 = vadd.f32 %v1317, %v1359
    %v1361 = vpop.f32.mrb[0].mxu0
    %v1362 = vadd.f32 %v1319, %v1361
    %v1363 = vpop.f32.mrb[0].mxu0
    %v1364 = vadd.f32 %v1321, %v1363
    %v1365 = vpop.f32.mrb[0].mxu0
    %v1366 = vadd.f32 %v1323, %v1365
    %1367 = vdwg.mxu0
    %1368 = vmatprep.subr.bf16.mxu0 %v1015
    %1369 = vmatpush1.bf16.msra.mxu0 %v1014
    %1370 = vmatprep.subr.bf16.mxu0 %v1019
    %1371 = vmatpush1.bf16.msra.mxu0 %v1018
    %1372 = vmatprep.subr.bf16.mxu0 %v1023
    %1373 = vmatpush1.bf16.msra.mxu0 %v1022
    %1374 = vmatprep.subr.bf16.mxu0 %v1027
    %1375 = vmatpush1.bf16.msra.mxu0 %v1026
    %1376 = vmatprep.subr.bf16.mxu0 %v1031
    %1377 = vmatpush1.bf16.msra.mxu0 %v1030
    %1378 = vmatprep.subr.bf16.mxu0 %v1035
    %1379 = vmatpush1.bf16.msra.mxu0 %v1034
    %1380 = vmatprep.subr.bf16.mxu0 %v1039
    %1381 = vmatpush1.bf16.msra.mxu0 %v1038
    %1382 = vmatprep.subr.bf16.mxu0 %v1043
    %1383 = vmatpush1.bf16.msra.mxu0 %v1042
    %1384 = vmatprep.subr.bf16.mxu0 %v1047
    %1385 = vmatpush1.bf16.msra.mxu0 %v1046
    %1386 = vmatprep.subr.bf16.mxu0 %v1051
    %1387 = vmatpush1.bf16.msra.mxu0 %v1050
    %1388 = vmatprep.subr.bf16.mxu0 %v1055
    %1389 = vmatpush1.bf16.msra.mxu0 %v1054
    %1390 = vmatprep.subr.bf16.mxu0 %v1059
    %1391 = vmatpush1.bf16.msra.mxu0 %v1058
    %1392 = vmatprep.subr.bf16.mxu0 %v1063
    %1393 = vmatpush1.bf16.msra.mxu0 %v1062
    %1394 = vmatprep.subr.bf16.mxu0 %v1067
    %1395 = vmatpush1.bf16.msra.mxu0 %v1066
    %1396 = vmatprep.subr.bf16.mxu0 %v1071
    %1397 = vmatpush1.bf16.msra.mxu0 %v1070
    %1398 = vmatprep.subr.bf16.mxu0 %v1075
    %1399 = vmatpush1.bf16.msra.mxu0 %v1074
    %1400 = vmatprep.mubr.bf16.mxu0 %v78
    %1401 = vmatmul.mubr.bf16.gmra.mrb[0].mxu0 %v77
    %v1402 = vpop.f32.mrb[0].mxu0
    %v1403 = vadd.f32 %v1360, %v1402
    %v1404 = vpop.f32.mrb[0].mxu0
    %v1405 = vadd.f32 %v1362, %v1404
    %v1406 = vpop.f32.mrb[0].mxu0
    %v1407 = vadd.f32 %v1364, %v1406
    %v1408 = vpop.f32.mrb[0].mxu0
    %v1409 = vadd.f32 %v1366, %v1408
    %1410 = vdwg.mxu0
    %1411 = vmatprep.subr.bf16.mxu0 %v1079
    %1412 = vmatpush1.bf16.msra.mxu0 %v1078
    %1413 = vmatprep.subr.bf16.mxu0 0
    %1414 = vmatpush1.bf16.msra.mxu0 0
    %1415 = vmatprep.subr.bf16.mxu0 0
    %1416 = vmatpush1.bf16.msra.mxu0 0
    %1417 = vmatprep.subr.bf16.mxu0 0
    %1418 = vmatpush1.bf16.msra.mxu0 0
    %1419 = vmatprep.subr.bf16.mxu0 0
    %1420 = vmatpush1.bf16.msra.mxu0 0
    %1421 = vmatprep.subr.bf16.mxu0 0
    %1422 = vmatpush1.bf16.msra.mxu0 0
    %1423 = vmatprep.subr.bf16.mxu0 0
    %1424 = vmatpush1.bf16.msra.mxu0 0
    %1425 = vmatprep.subr.bf16.mxu0 0
    %1426 = vmatpush1.bf16.msra.mxu0 0
    %1427 = vmatprep.subr.bf16.mxu0 0
    %1428 = vmatpush1.bf16.msra.mxu0 0
    %1429 = vmatprep.subr.bf16.mxu0 0
    %1430 = vmatpush1.bf16.msra.mxu0 0
    %1431 = vmatprep.subr.bf16.mxu0 0
    %1432 = vmatpush1.bf16.msra.mxu0 0
    %1433 = vmatprep.subr.bf16.mxu0 0
    %1434 = vmatpush1.bf16.msra.mxu0 0
    %1435 = vmatprep.subr.bf16.mxu0 0
    %1436 = vmatpush1.bf16.msra.mxu0 0
    %1437 = vmatprep.subr.bf16.mxu0 0
    %1438 = vmatpush1.bf16.msra.mxu0 0
    %1439 = vmatprep.subr.bf16.mxu0 0
    %1440 = vmatpush1.bf16.msra.mxu0 0
    %1441 = vmatprep.subr.bf16.mxu0 0
    %1442 = vmatpush1.bf16.msra.mxu0 0
    %1443 = vmatprep.mubr.bf16.mxu0 0
    %1444 = vmatmul.mubr.bf16.gmra.mrb[0].mxu0 %v1280
    %v1445 = vpop.f32.mrb[0].mxu0
    %v1446 = vadd.f32 %v1403, %v1445
    %v1447 = vpop.f32.mrb[0].mxu0
    %v1448 = vadd.f32 %v1405, %v1447
    %v1449 = vpop.f32.mrb[0].mxu0
    %v1450 = vadd.f32 %v1407, %v1449
    %v1451 = vpop.f32.mrb[0].mxu0
    %v1452 = vadd.f32 %v1409, %v1451
    %1453 = vdwg.mxu0
    %1454 = vmatprep.subr.bf16.mxu0 %v889
    %1455 = vmatpush1.bf16.msra.mxu0 %v888
    %1456 = vmatprep.subr.bf16.mxu0 %v893
    %1457 = vmatpush1.bf16.msra.mxu0 %v892
    %1458 = vmatprep.subr.bf16.mxu0 %v897
    %1459 = vmatpush1.bf16.msra.mxu0 %v896
    %1460 = vmatprep.subr.bf16.mxu0 %v901
    %1461 = vmatpush1.bf16.msra.mxu0 %v900
    %1462 = vmatprep.subr.bf16.mxu0 %v905
    %1463 = vmatpush1.bf16.msra.mxu0 %v904
    %1464 = vmatprep.subr.bf16.mxu0 %v909
    %1465 = vmatpush1.bf16.msra.mxu0 %v908
    %1466 = vmatprep.subr.bf16.mxu0 %v913
    %1467 = vmatpush1.bf16.msra.mxu0 %v912
    %1468 = vmatprep.subr.bf16.mxu0 %v917
    %1469 = vmatpush1.bf16.msra.mxu0 %v916
    %1470 = vmatprep.subr.bf16.mxu0 %v921
    %1471 = vmatpush1.bf16.msra.mxu0 %v920
    %1472 = vmatprep.subr.bf16.mxu0 %v925
    %1473 = vmatpush1.bf16.msra.mxu0 %v924
    %1474 = vmatprep.subr.bf16.mxu0 %v929
    %1475 = vmatpush1.bf16.msra.mxu0 %v928
    %1476 = vmatprep.subr.bf16.mxu0 %v933
    %1477 = vmatpush1.bf16.msra.mxu0 %v932
    %1478 = vmatprep.subr.bf16.mxu0 %v937
    %1479 = vmatpush1.bf16.msra.mxu0 %v936
    %1480 = vmatprep.subr.bf16.mxu0 %v941
    %1481 = vmatpush1.bf16.msra.mxu0 %v940
    %1482 = vmatprep.subr.bf16.mxu0 %v945
    %1483 = vmatpush1.bf16.msra.mxu0 %v944
    %1484 = vmatprep.subr.bf16.mxu0 %v949
    %1485 = vmatpush1.bf16.msra.mxu0 %v948
    %1486 = vmatprep.mubr.bf16.mxu0 %v74
    %1487 = vmatmul.mubr.bf16.gmra.mrb[0].mxu0 %v73
    %v1488 = vpop.f32.mrb[0].mxu0
    %v1489 = vadd.f32 %v289, %v1488
    %v1490 = vpop.f32.mrb[0].mxu0
    %v1491 = vadd.f32 %v293, %v1490
    %v1492 = vpop.f32.mrb[0].mxu0
    %v1493 = vadd.f32 %v289, %v1492
    %v1494 = vpop.f32.mrb[0].mxu0
    %v1495 = vadd.f32 %v293, %v1494
    %1496 = vdwg.mxu0
    %1497 = vmatprep.subr.bf16.mxu0 %v953
    %1498 = vmatpush1.bf16.msra.mxu0 %v952
    %1499 = vmatprep.subr.bf16.mxu0 %v957
    %1500 = vmatpush1.bf16.msra.mxu0 %v956
    %1501 = vmatprep.subr.bf16.mxu0 %v961
    %1502 = vmatpush1.bf16.msra.mxu0 %v960
    %1503 = vmatprep.subr.bf16.mxu0 %v965
    %1504 = vmatpush1.bf16.msra.mxu0 %v964
    %1505 = vmatprep.subr.bf16.mxu0 %v969
    %1506 = vmatpush1.bf16.msra.mxu0 %v968
    %1507 = vmatprep.subr.bf16.mxu0 %v973
    %1508 = vmatpush1.bf16.msra.mxu0 %v972
    %1509 = vmatprep.subr.bf16.mxu0 %v977
    %1510 = vmatpush1.bf16.msra.mxu0 %v976
    %1511 = vmatprep.subr.bf16.mxu0 %v981
    %1512 = vmatpush1.bf16.msra.mxu0 %v980
    %1513 = vmatprep.subr.bf16.mxu0 %v985
    %1514 = vmatpush1.bf16.msra.mxu0 %v984
    %1515 = vmatprep.subr.bf16.mxu0 %v989
    %1516 = vmatpush1.bf16.msra.mxu0 %v988
    %1517 = vmatprep.subr.bf16.mxu0 %v993
    %1518 = vmatpush1.bf16.msra.mxu0 %v992
    %1519 = vmatprep.subr.bf16.mxu0 %v997
    %1520 = vmatpush1.bf16.msra.mxu0 %v996
    %1521 = vmatprep.subr.bf16.mxu0 %v1001
    %1522 = vmatpush1.bf16.msra.mxu0 %v1000
    %1523 = vmatprep.subr.bf16.mxu0 %v1005
    %1524 = vmatpush1.bf16.msra.mxu0 %v1004
    %1525 = vmatprep.subr.bf16.mxu0 %v1009
    %1526 = vmatpush1.bf16.msra.mxu0 %v1008
    %1527 = vmatprep.subr.bf16.mxu0 %v1013
    %1528 = vmatpush1.bf16.msra.mxu0 %v1012
    %1529 = vmatprep.mubr.bf16.mxu0 %v76
    %1530 = vmatmul.mubr.bf16.gmra.mrb[0].mxu0 %v75
    %v1531 = vpop.f32.mrb[0].mxu0
    %v1532 = vadd.f32 %v1489, %v1531
    %v1533 = vpop.f32.mrb[0].mxu0
    %v1534 = vadd.f32 %v1491, %v1533
    %v1535 = vpop.f32.mrb[0].mxu0
    %v1536 = vadd.f32 %v1493, %v1535
    %v1537 = vpop.f32.mrb[0].mxu0
    %v1538 = vadd.f32 %v1495, %v1537
    %1539 = vdwg.mxu0
    %1540 = vmatprep.subr.bf16.mxu0 %v1017
    %1541 = vmatpush1.bf16.msra.mxu0 %v1016
    %1542 = vmatprep.subr.bf16.mxu0 %v1021
    %1543 = vmatpush1.bf16.msra.mxu0 %v1020
    %1544 = vmatprep.subr.bf16.mxu0 %v1025
    %1545 = vmatpush1.bf16.msra.mxu0 %v1024
    %1546 = vmatprep.subr.bf16.mxu0 %v1029
    %1547 = vmatpush1.bf16.msra.mxu0 %v1028
    %1548 = vmatprep.subr.bf16.mxu0 %v1033
    %1549 = vmatpush1.bf16.msra.mxu0 %v1032
    %1550 = vmatprep.subr.bf16.mxu0 %v1037
    %1551 = vmatpush1.bf16.msra.mxu0 %v1036
    %1552 = vmatprep.subr.bf16.mxu0 %v1041
    %1553 = vmatpush1.bf16.msra.mxu0 %v1040
    %1554 = vmatprep.subr.bf16.mxu0 %v1045
    %1555 = vmatpush1.bf16.msra.mxu0 %v1044
    %1556 = vmatprep.subr.bf16.mxu0 %v1049
    %1557 = vmatpush1.bf16.msra.mxu0 %v1048
    %1558 = vmatprep.subr.bf16.mxu0 %v1053
    %1559 = vmatpush1.bf16.msra.mxu0 %v1052
    %1560 = vmatprep.subr.bf16.mxu0 %v1057
    %1561 = vmatpush1.bf16.msra.mxu0 %v1056
    %1562 = vmatprep.subr.bf16.mxu0 %v1061
    %1563 = vmatpush1.bf16.msra.mxu0 %v1060
    %1564 = vmatprep.subr.bf16.mxu0 %v1065
    %1565 = vmatpush1.bf16.msra.mxu0 %v1064
    %1566 = vmatprep.subr.bf16.mxu0 %v1069
    %1567 = vmatpush1.bf16.msra.mxu0 %v1068
    %1568 = vmatprep.subr.bf16.mxu0 %v1073
    %1569 = vmatpush1.bf16.msra.mxu0 %v1072
    %1570 = vmatprep.subr.bf16.mxu0 %v1077
    %1571 = vmatpush1.bf16.msra.mxu0 %v1076
    %1572 = vmatprep.mubr.bf16.mxu0 %v78
    %1573 = vmatmul.mubr.bf16.gmra.mrb[0].mxu0 %v77
    %v1574 = vpop.f32.mrb[0].mxu0
    %v1575 = vadd.f32 %v1532, %v1574
    %v1576 = vpop.f32.mrb[0].mxu0
    %v1577 = vadd.f32 %v1534, %v1576
    %v1578 = vpop.f32.mrb[0].mxu0
    %v1579 = vadd.f32 %v1536, %v1578
    %v1580 = vpop.f32.mrb[0].mxu0
    %v1581 = vadd.f32 %v1538, %v1580
    %1582 = vdwg.mxu0
    %1583 = vmatprep.subr.bf16.mxu0 %v1081
    %1584 = vmatpush1.bf16.msra.mxu0 %v1080
    %1585 = vmatprep.subr.bf16.mxu0 0
    %1586 = vmatpush1.bf16.msra.mxu0 0
    %1587 = vmatprep.subr.bf16.mxu0 0
    %1588 = vmatpush1.bf16.msra.mxu0 0
    %1589 = vmatprep.subr.bf16.mxu0 0
    %1590 = vmatpush1.bf16.msra.mxu0 0
    %1591 = vmatprep.subr.bf16.mxu0 0
    %1592 = vmatpush1.bf16.msra.mxu0 0
    %1593 = vmatprep.subr.bf16.mxu0 0
    %1594 = vmatpush1.bf16.msra.mxu0 0
    %1595 = vmatprep.subr.bf16.mxu0 0
    %1596 = vmatpush1.bf16.msra.mxu0 0
    %1597 = vmatprep.subr.bf16.mxu0 0
    %1598 = vmatpush1.bf16.msra.mxu0 0
    %1599 = vmatprep.subr.bf16.mxu0 0
    %1600 = vmatpush1.bf16.msra.mxu0 0
    %1601 = vmatprep.subr.bf16.mxu0 0
    %1602 = vmatpush1.bf16.msra.mxu0 0
    %1603 = vmatprep.subr.bf16.mxu0 0
    %1604 = vmatpush1.bf16.msra.mxu0 0
    %1605 = vmatprep.subr.bf16.mxu0 0
    %1606 = vmatpush1.bf16.msra.mxu0 0
    %1607 = vmatprep.subr.bf16.mxu0 0
    %1608 = vmatpush1.bf16.msra.mxu0 0
    %1609 = vmatprep.subr.bf16.mxu0 0
    %1610 = vmatpush1.bf16.msra.mxu0 0
    %1611 = vmatprep.subr.bf16.mxu0 0
    %1612 = vmatpush1.bf16.msra.mxu0 0
    %1613 = vmatprep.subr.bf16.mxu0 0
    %1614 = vmatpush1.bf16.msra.mxu0 0
    %1615 = vmatprep.mubr.bf16.mxu0 0
    %1616 = vmatmul.mubr.bf16.gmra.mrb[0].mxu0 %v1280
    %v1617 = vpop.f32.mrb[0].mxu0
    %v1618 = vadd.f32 %v1575, %v1617
    %v1619 = vpop.f32.mrb[0].mxu0
    %v1620 = vadd.f32 %v1577, %v1619
    %v1621 = vpop.f32.mrb[0].mxu0
    %v1622 = vadd.f32 %v1579, %v1621
    %v1623 = vpop.f32.mrb[0].mxu0
    %v1624 = vadd.f32 %v1581, %v1623
    %1625 = vdwg.mxu0
    %v1626 = vmax.f32 %v1446, 0.0
    %v1627 = vmax.f32 %v1448, 0.0
    %v1628 = vmax.f32 %v1618, 0.0
    %v1629 = vmax.f32 %v1620, 0.0
    %v1630 = vmax.f32 %v1450, 0.0
    %v1631 = vmax.f32 %v1452, 0.0
    %v1632 = vmax.f32 %v1622, 0.0
    %v1633 = vmax.f32 %v1624, 0.0
    %v1634 = vpack.c.bf16 %v1630, %v1626
    %v1635 = vpack.c.bf16 %v1631, %v1627
    %v1636 = vpack.c.bf16 %v1632, %v1628
    %v1637 = vpack.c.bf16 %v1633, %v1629
    %v1642 = vunpack.c.l.b16 %v1634
    %v1643 = vunpack.c.l.b16 %v1635
    %v1644 = vunpack.c.l.b16 %v1636
    %v1645 = vunpack.c.l.b16 %v1637
    %v1646 = vunpack.c.h.b16 %v1634
    %v1647 = vunpack.c.h.b16 %v1635
    %v1648 = vunpack.c.h.b16 %v1636
    %v1649 = vunpack.c.h.b16 %v1637
    %v1650 = vpack.c.b16 %v1643, %v1642
    %v1651 = vpack.c.b16 %v1645, %v1644
    %v1652 = vpack.c.b16 %v1647, %v1646
    %v1653 = vpack.c.b16 %v1649, %v1648
    %1658 = vst [vmem:[%s8] sm:$0xff] %v1650
    %1659 = vst [vmem:[%s8 + $0x8] sm:$0xff] %v1651
    %1660 = vst [vmem:[%s8 + $0x10] sm:$0xff] %v1652
    %1661 = vst [vmem:[%s8 + $0x18] sm:$0xff] %v1653
    %v1662 = vld [vmem:[#allocation4] sm:$0xff]
    %v1663 = vld [vmem:[#allocation4 + $0x8] sm:$0xff]
    %v1664 = vld [vmem:[#allocation4 + $0x10] sm:$0xff]
    %v1665 = vld [vmem:[#allocation4 + $0x18] sm:$0xff]
    %v1666 = vld [vmem:[#allocation4 + $0x20] sm:$0xff]
    %v1667 = vld [vmem:[#allocation4 + $0x28] sm:$0xff]
    %v1668 = vld [vmem:[#allocation4 + $0x30] sm:$0xff]
    %v1669 = vld [vmem:[#allocation4 + $0x38] sm:$0xff]
    %v1670 = vld [vmem:[#allocation4 + $0x40] sm:$0xff]
    %v1671 = vld [vmem:[#allocation4 + $0x48] sm:$0xff]
    %v1672 = vld [vmem:[#allocation4 + $0x50] sm:$0xff]
    %v1673 = vld [vmem:[#allocation4 + $0x58] sm:$0xff]
    %v1674 = vld [vmem:[#allocation4 + $0x60] sm:$0xff]
    %v1675 = vld [vmem:[#allocation4 + $0x68] sm:$0xff]
    %v1676 = vld [vmem:[#allocation4 + $0x70] sm:$0xff]
    %v1677 = vld [vmem:[#allocation4 + $0x78] sm:$0xff]
    %v1678 = vld [vmem:[#allocation4 + $0x80] sm:$0xff]
    %v1679 = vld [vmem:[#allocation4 + $0x88] sm:$0xff]
    %v1680 = vld [vmem:[#allocation4 + $0x90] sm:$0xff]
    %v1681 = vld [vmem:[#allocation4 + $0x98] sm:$0xff]
    %v1682 = vld [vmem:[#allocation4 + $0xa0] sm:$0xff]
    %v1683 = vld [vmem:[#allocation4 + $0xa8] sm:$0xff]
    %v1684 = vld [vmem:[#allocation4 + $0xb0] sm:$0xff]
    %v1685 = vld [vmem:[#allocation4 + $0xb8] sm:$0xff]
    %v1686 = vld [vmem:[#allocation4 + $0xc0] sm:$0xff]
    %v1687 = vld [vmem:[#allocation4 + $0xc8] sm:$0xff]
    %v1688 = vld [vmem:[#allocation4 + $0xd0] sm:$0xff]
    %v1689 = vld [vmem:[#allocation4 + $0xd8] sm:$0xff]
    %v1690 = vld [vmem:[#allocation4 + $0xe0] sm:$0xff]
    %v1691 = vld [vmem:[#allocation4 + $0xe8] sm:$0xff]
    %v1692 = vld [vmem:[#allocation4 + $0xf0] sm:$0xff]
    %v1693 = vld [vmem:[#allocation4 + $0xf8] sm:$0xff]
    %v1694 = vld [vmem:[#allocation4 + $0x100] sm:$0xff]
    %v1695 = vld [vmem:[#allocation4 + $0x108] sm:$0xff]
    %v1696 = vld [vmem:[#allocation4 + $0x110] sm:$0xff]
    %v1697 = vld [vmem:[#allocation4 + $0x118] sm:$0xff]
    %v1698 = vld [vmem:[#allocation4 + $0x120] sm:$0xff]
    %v1699 = vld [vmem:[#allocation4 + $0x128] sm:$0xff]
    %v1700 = vld [vmem:[#allocation4 + $0x130] sm:$0xff]
    %v1701 = vld [vmem:[#allocation4 + $0x138] sm:$0xff]
    %v1702 = vld [vmem:[#allocation4 + $0x140] sm:$0xff]
    %v1703 = vld [vmem:[#allocation4 + $0x148] sm:$0xff]
    %v1704 = vld [vmem:[#allocation4 + $0x150] sm:$0xff]
    %v1705 = vld [vmem:[#allocation4 + $0x158] sm:$0xff]
    %v1706 = vld [vmem:[#allocation4 + $0x160] sm:$0xff]
    %v1707 = vld [vmem:[#allocation4 + $0x168] sm:$0xff]
    %v1708 = vld [vmem:[#allocation4 + $0x170] sm:$0xff]
    %v1709 = vld [vmem:[#allocation4 + $0x178] sm:$0xff]
    %v1710 = vld [vmem:[#allocation4 + $0x180] sm:$0xff]
    %v1711 = vld [vmem:[#allocation4 + $0x188] sm:$0xff]
    %v1712 = vld [vmem:[#allocation4 + $0x190] sm:$0xff]
    %v1713 = vld [vmem:[#allocation4 + $0x198] sm:$0xff]
    %v1714 = vld [vmem:[#allocation4 + $0x1a0] sm:$0xff]
    %v1715 = vld [vmem:[#allocation4 + $0x1a8] sm:$0xff]
    %v1716 = vld [vmem:[#allocation4 + $0x1b0] sm:$0xff]
    %v1717 = vld [vmem:[#allocation4 + $0x1b8] sm:$0xff]
    %v1718 = vld [vmem:[#allocation4 + $0x1c0] sm:$0xff]
    %v1719 = vld [vmem:[#allocation4 + $0x1c8] sm:$0xff]
    %v1720 = vld [vmem:[#allocation4 + $0x1d0] sm:$0xff]
    %v1721 = vld [vmem:[#allocation4 + $0x1d8] sm:$0xff]
    %v1722 = vld [vmem:[#allocation4 + $0x1e0] sm:$0xff]
    %v1723 = vld [vmem:[#allocation4 + $0x1e8] sm:$0xff]
    %v1724 = vld [vmem:[#allocation4 + $0x1f0] sm:$0xff]
    %v1725 = vld [vmem:[#allocation4 + $0x1f8] sm:$0xff]
    %v1726 = vld [vmem:[%s4] sm:$0x3]
    %v1728 = vlaneseq
    %v1729 = vshrl.u32 %v1728, 7
    %v1730 = vsub.s32 0, %v1729
    %v1731 = vrot.slane %v1726, %v1730
    %v1732 = vlaneseq
    %v1733 = vshrl.u32 %v1732, 7
    %v1734 = vsub.s32 1, %v1733
    %v1735 = vrot.slane %v1726, %v1734
    %v1802 = vunpack.c.l.b16 %v1662
    %v1803 = vunpack.c.h.b16 %v1662
    %v1804 = vunpack.c.l.b16 %v1663
    %v1805 = vunpack.c.h.b16 %v1663
    %v1806 = vunpack.c.l.b16 %v1664
    %v1807 = vunpack.c.h.b16 %v1664
    %v1808 = vunpack.c.l.b16 %v1665
    %v1809 = vunpack.c.h.b16 %v1665
    %v1810 = vunpack.c.l.b16 %v1666
    %v1811 = vunpack.c.h.b16 %v1666
    %v1812 = vunpack.c.l.b16 %v1667
    %v1813 = vunpack.c.h.b16 %v1667
    %v1814 = vunpack.c.l.b16 %v1668
    %v1815 = vunpack.c.h.b16 %v1668
    %v1816 = vunpack.c.l.b16 %v1669
    %v1817 = vunpack.c.h.b16 %v1669
    %v1818 = vunpack.c.l.b16 %v1670
    %v1819 = vunpack.c.h.b16 %v1670
    %v1820 = vunpack.c.l.b16 %v1671
    %v1821 = vunpack.c.h.b16 %v1671
    %v1822 = vunpack.c.l.b16 %v1672
    %v1823 = vunpack.c.h.b16 %v1672
    %v1824 = vunpack.c.l.b16 %v1673
    %v1825 = vunpack.c.h.b16 %v1673
    %v1826 = vunpack.c.l.b16 %v1674
    %v1827 = vunpack.c.h.b16 %v1674
    %v1828 = vunpack.c.l.b16 %v1675
    %v1829 = vunpack.c.h.b16 %v1675
    %v1830 = vunpack.c.l.b16 %v1676
    %v1831 = vunpack.c.h.b16 %v1676
    %v1832 = vunpack.c.l.b16 %v1677
    %v1833 = vunpack.c.h.b16 %v1677
    %v1834 = vunpack.c.l.b16 %v1678
    %v1835 = vunpack.c.h.b16 %v1678
    %v1836 = vunpack.c.l.b16 %v1679
    %v1837 = vunpack.c.h.b16 %v1679
    %v1838 = vunpack.c.l.b16 %v1680
    %v1839 = vunpack.c.h.b16 %v1680
    %v1840 = vunpack.c.l.b16 %v1681
    %v1841 = vunpack.c.h.b16 %v1681
    %v1842 = vunpack.c.l.b16 %v1682
    %v1843 = vunpack.c.h.b16 %v1682
    %v1844 = vunpack.c.l.b16 %v1683
    %v1845 = vunpack.c.h.b16 %v1683
    %v1846 = vunpack.c.l.b16 %v1684
    %v1847 = vunpack.c.h.b16 %v1684
    %v1848 = vunpack.c.l.b16 %v1685
    %v1849 = vunpack.c.h.b16 %v1685
    %v1850 = vunpack.c.l.b16 %v1686
    %v1851 = vunpack.c.h.b16 %v1686
    %v1852 = vunpack.c.l.b16 %v1687
    %v1853 = vunpack.c.h.b16 %v1687
    %v1854 = vunpack.c.l.b16 %v1688
    %v1855 = vunpack.c.h.b16 %v1688
    %v1856 = vunpack.c.l.b16 %v1689
    %v1857 = vunpack.c.h.b16 %v1689
    %v1858 = vunpack.c.l.b16 %v1690
    %v1859 = vunpack.c.h.b16 %v1690
    %v1860 = vunpack.c.l.b16 %v1691
    %v1861 = vunpack.c.h.b16 %v1691
    %v1862 = vunpack.c.l.b16 %v1692
    %v1863 = vunpack.c.h.b16 %v1692
    %v1864 = vunpack.c.l.b16 %v1693
    %v1865 = vunpack.c.h.b16 %v1693
    %v1866 = vunpack.c.l.b16 %v1694
    %v1867 = vunpack.c.h.b16 %v1694
    %v1868 = vunpack.c.l.b16 %v1695
    %v1869 = vunpack.c.h.b16 %v1695
    %v1870 = vunpack.c.l.b16 %v1696
    %v1871 = vunpack.c.h.b16 %v1696
    %v1872 = vunpack.c.l.b16 %v1697
    %v1873 = vunpack.c.h.b16 %v1697
    %v1874 = vunpack.c.l.b16 %v1698
    %v1875 = vunpack.c.h.b16 %v1698
    %v1876 = vunpack.c.l.b16 %v1699
    %v1877 = vunpack.c.h.b16 %v1699
    %v1878 = vunpack.c.l.b16 %v1700
    %v1879 = vunpack.c.h.b16 %v1700
    %v1880 = vunpack.c.l.b16 %v1701
    %v1881 = vunpack.c.h.b16 %v1701
    %v1882 = vunpack.c.l.b16 %v1702
    %v1883 = vunpack.c.h.b16 %v1702
    %v1884 = vunpack.c.l.b16 %v1703
    %v1885 = vunpack.c.h.b16 %v1703
    %v1886 = vunpack.c.l.b16 %v1704
    %v1887 = vunpack.c.h.b16 %v1704
    %v1888 = vunpack.c.l.b16 %v1705
    %v1889 = vunpack.c.h.b16 %v1705
    %v1890 = vunpack.c.l.b16 %v1706
    %v1891 = vunpack.c.h.b16 %v1706
    %v1892 = vunpack.c.l.b16 %v1707
    %v1893 = vunpack.c.h.b16 %v1707
    %v1894 = vunpack.c.l.b16 %v1708
    %v1895 = vunpack.c.h.b16 %v1708
    %v1896 = vunpack.c.l.b16 %v1709
    %v1897 = vunpack.c.h.b16 %v1709
    %v1898 = vunpack.c.l.b16 %v1710
    %v1899 = vunpack.c.h.b16 %v1710
    %v1900 = vunpack.c.l.b16 %v1711
    %v1901 = vunpack.c.h.b16 %v1711
    %v1902 = vunpack.c.l.b16 %v1712
    %v1903 = vunpack.c.h.b16 %v1712
    %v1904 = vunpack.c.l.b16 %v1713
    %v1905 = vunpack.c.h.b16 %v1713
    %v1906 = vunpack.c.l.b16 %v1714
    %v1907 = vunpack.c.h.b16 %v1714
    %v1908 = vunpack.c.l.b16 %v1715
    %v1909 = vunpack.c.h.b16 %v1715
    %v1910 = vunpack.c.l.b16 %v1716
    %v1911 = vunpack.c.h.b16 %v1716
    %v1912 = vunpack.c.l.b16 %v1717
    %v1913 = vunpack.c.h.b16 %v1717
    %v1914 = vunpack.c.l.b16 %v1718
    %v1915 = vunpack.c.h.b16 %v1718
    %v1916 = vunpack.c.l.b16 %v1719
    %v1917 = vunpack.c.h.b16 %v1719
    %v1918 = vunpack.c.l.b16 %v1720
    %v1919 = vunpack.c.h.b16 %v1720
    %v1920 = vunpack.c.l.b16 %v1721
    %v1921 = vunpack.c.h.b16 %v1721
    %v1922 = vunpack.c.l.b16 %v1722
    %v1923 = vunpack.c.h.b16 %v1722
    %v1924 = vunpack.c.l.b16 %v1723
    %v1925 = vunpack.c.h.b16 %v1723
    %v1926 = vunpack.c.l.b16 %v1724
    %v1927 = vunpack.c.h.b16 %v1724
    %v1928 = vunpack.c.l.b16 %v1725
    %v1929 = vunpack.c.h.b16 %v1725
    %v1930 = vpack.c.b16 %v1804, %v1802
    %v1931 = vpack.c.b16 %v1805, %v1803
    %v1932 = vpack.c.b16 %v1808, %v1806
    %v1933 = vpack.c.b16 %v1809, %v1807
    %v1934 = vpack.c.b16 %v1812, %v1810
    %v1935 = vpack.c.b16 %v1813, %v1811
    %v1936 = vpack.c.b16 %v1816, %v1814
    %v1937 = vpack.c.b16 %v1817, %v1815
    %v1938 = vpack.c.b16 %v1820, %v1818
    %v1939 = vpack.c.b16 %v1821, %v1819
    %v1940 = vpack.c.b16 %v1824, %v1822
    %v1941 = vpack.c.b16 %v1825, %v1823
    %v1942 = vpack.c.b16 %v1828, %v1826
    %v1943 = vpack.c.b16 %v1829, %v1827
    %v1944 = vpack.c.b16 %v1832, %v1830
    %v1945 = vpack.c.b16 %v1833, %v1831
    %v1946 = vpack.c.b16 %v1836, %v1834
    %v1947 = vpack.c.b16 %v1837, %v1835
    %v1948 = vpack.c.b16 %v1840, %v1838
    %v1949 = vpack.c.b16 %v1841, %v1839
    %v1950 = vpack.c.b16 %v1844, %v1842
    %v1951 = vpack.c.b16 %v1845, %v1843
    %v1952 = vpack.c.b16 %v1848, %v1846
    %v1953 = vpack.c.b16 %v1849, %v1847
    %v1954 = vpack.c.b16 %v1852, %v1850
    %v1955 = vpack.c.b16 %v1853, %v1851
    %v1956 = vpack.c.b16 %v1856, %v1854
    %v1957 = vpack.c.b16 %v1857, %v1855
    %v1958 = vpack.c.b16 %v1860, %v1858
    %v1959 = vpack.c.b16 %v1861, %v1859
    %v1960 = vpack.c.b16 %v1864, %v1862
    %v1961 = vpack.c.b16 %v1865, %v1863
    %v1962 = vpack.c.b16 %v1868, %v1866
    %v1963 = vpack.c.b16 %v1869, %v1867
    %v1964 = vpack.c.b16 %v1872, %v1870
    %v1965 = vpack.c.b16 %v1873, %v1871
    %v1966 = vpack.c.b16 %v1876, %v1874
    %v1967 = vpack.c.b16 %v1877, %v1875
    %v1968 = vpack.c.b16 %v1880, %v1878
    %v1969 = vpack.c.b16 %v1881, %v1879
    %v1970 = vpack.c.b16 %v1884, %v1882
    %v1971 = vpack.c.b16 %v1885, %v1883
    %v1972 = vpack.c.b16 %v1888, %v1886
    %v1973 = vpack.c.b16 %v1889, %v1887
    %v1974 = vpack.c.b16 %v1892, %v1890
    %v1975 = vpack.c.b16 %v1893, %v1891
    %v1976 = vpack.c.b16 %v1896, %v1894
    %v1977 = vpack.c.b16 %v1897, %v1895
    %v1978 = vpack.c.b16 %v1900, %v1898
    %v1979 = vpack.c.b16 %v1901, %v1899
    %v1980 = vpack.c.b16 %v1904, %v1902
    %v1981 = vpack.c.b16 %v1905, %v1903
    %v1982 = vpack.c.b16 %v1908, %v1906
    %v1983 = vpack.c.b16 %v1909, %v1907
    %v1984 = vpack.c.b16 %v1912, %v1910
    %v1985 = vpack.c.b16 %v1913, %v1911
    %v1986 = vpack.c.b16 %v1916, %v1914
    %v1987 = vpack.c.b16 %v1917, %v1915
    %v1988 = vpack.c.b16 %v1920, %v1918
    %v1989 = vpack.c.b16 %v1921, %v1919
    %v1990 = vpack.c.b16 %v1924, %v1922
    %v1991 = vpack.c.b16 %v1925, %v1923
    %v1992 = vpack.c.b16 %v1928, %v1926
    %v1993 = vpack.c.b16 %v1929, %v1927
    %2058 = vmatprep.subr.bf16.mxu0 %v1931
    %2059 = vmatpush1.bf16.msra.mxu0 %v1930
    %2060 = vmatprep.subr.bf16.mxu0 %v1933
    %2061 = vmatpush1.bf16.msra.mxu0 %v1932
    %2062 = vmatprep.subr.bf16.mxu0 %v1935
    %2063 = vmatpush1.bf16.msra.mxu0 %v1934
    %2064 = vmatprep.subr.bf16.mxu0 %v1937
    %2065 = vmatpush1.bf16.msra.mxu0 %v1936
    %2066 = vmatprep.subr.bf16.mxu0 %v1939
    %2067 = vmatpush1.bf16.msra.mxu0 %v1938
    %2068 = vmatprep.subr.bf16.mxu0 %v1941
    %2069 = vmatpush1.bf16.msra.mxu0 %v1940
    %2070 = vmatprep.subr.bf16.mxu0 %v1943
    %2071 = vmatpush1.bf16.msra.mxu0 %v1942
    %2072 = vmatprep.subr.bf16.mxu0 %v1945
    %2073 = vmatpush1.bf16.msra.mxu0 %v1944
    %2074 = vmatprep.subr.bf16.mxu0 %v1947
    %2075 = vmatpush1.bf16.msra.mxu0 %v1946
    %2076 = vmatprep.subr.bf16.mxu0 %v1949
    %2077 = vmatpush1.bf16.msra.mxu0 %v1948
    %2078 = vmatprep.subr.bf16.mxu0 %v1951
    %2079 = vmatpush1.bf16.msra.mxu0 %v1950
    %2080 = vmatprep.subr.bf16.mxu0 %v1953
    %2081 = vmatpush1.bf16.msra.mxu0 %v1952
    %2082 = vmatprep.subr.bf16.mxu0 %v1955
    %2083 = vmatpush1.bf16.msra.mxu0 %v1954
    %2084 = vmatprep.subr.bf16.mxu0 %v1957
    %2085 = vmatpush1.bf16.msra.mxu0 %v1956
    %2086 = vmatprep.subr.bf16.mxu0 %v1959
    %2087 = vmatpush1.bf16.msra.mxu0 %v1958
    %2088 = vmatprep.subr.bf16.mxu0 %v1961
    %2089 = vmatpush1.bf16.msra.mxu0 %v1960
    %2090 = vmatprep.mubr.bf16.mxu0 %v1635
    %2091 = vmatmul.mubr.bf16.gmra.mrb[0].mxu0 %v1634
    %v2092 = vpop.f32.mrb[0].mxu0
    %v2093 = vadd.f32 %v1731, %v2092
    %v2094 = vpop.f32.mrb[0].mxu0
    %v2095 = vadd.f32 %v1735, %v2094
    %v2096 = vpop.f32.mrb[0].mxu0
    %v2097 = vadd.f32 %v1731, %v2096
    %v2098 = vpop.f32.mrb[0].mxu0
    %v2099 = vadd.f32 %v1735, %v2098
    %2100 = vdwg.mxu0
    %2101 = vmatprep.subr.bf16.mxu0 %v1963
    %2102 = vmatpush1.bf16.msra.mxu0 %v1962
    %2103 = vmatprep.subr.bf16.mxu0 %v1965
    %2104 = vmatpush1.bf16.msra.mxu0 %v1964
    %2105 = vmatprep.subr.bf16.mxu0 %v1967
    %2106 = vmatpush1.bf16.msra.mxu0 %v1966
    %2107 = vmatprep.subr.bf16.mxu0 %v1969
    %2108 = vmatpush1.bf16.msra.mxu0 %v1968
    %2109 = vmatprep.subr.bf16.mxu0 %v1971
    %2110 = vmatpush1.bf16.msra.mxu0 %v1970
    %2111 = vmatprep.subr.bf16.mxu0 %v1973
    %2112 = vmatpush1.bf16.msra.mxu0 %v1972
    %2113 = vmatprep.subr.bf16.mxu0 %v1975
    %2114 = vmatpush1.bf16.msra.mxu0 %v1974
    %2115 = vmatprep.subr.bf16.mxu0 %v1977
    %2116 = vmatpush1.bf16.msra.mxu0 %v1976
    %2117 = vmatprep.subr.bf16.mxu0 %v1979
    %2118 = vmatpush1.bf16.msra.mxu0 %v1978
    %2119 = vmatprep.subr.bf16.mxu0 %v1981
    %2120 = vmatpush1.bf16.msra.mxu0 %v1980
    %2121 = vmatprep.subr.bf16.mxu0 %v1983
    %2122 = vmatpush1.bf16.msra.mxu0 %v1982
    %2123 = vmatprep.subr.bf16.mxu0 %v1985
    %2124 = vmatpush1.bf16.msra.mxu0 %v1984
    %2125 = vmatprep.subr.bf16.mxu0 %v1987
    %2126 = vmatpush1.bf16.msra.mxu0 %v1986
    %2127 = vmatprep.subr.bf16.mxu0 %v1989
    %2128 = vmatpush1.bf16.msra.mxu0 %v1988
    %2129 = vmatprep.subr.bf16.mxu0 %v1991
    %2130 = vmatpush1.bf16.msra.mxu0 %v1990
    %2131 = vmatprep.subr.bf16.mxu0 %v1993
    %2132 = vmatpush1.bf16.msra.mxu0 %v1992
    %2133 = vmatprep.mubr.bf16.mxu0 %v1637
    %2134 = vmatmul.mubr.bf16.gmra.mrb[0].mxu0 %v1636
    %v2135 = vpop.f32.mrb[0].mxu0
    %v2136 = vadd.f32 %v2093, %v2135
    %v2137 = vpop.f32.mrb[0].mxu0
    %v2138 = vadd.f32 %v2095, %v2137
    %v2139 = vpop.f32.mrb[0].mxu0
    %v2140 = vadd.f32 %v2097, %v2139
    %v2141 = vpop.f32.mrb[0].mxu0
    %v2142 = vadd.f32 %v2099, %v2141
    %2143 = vdwg.mxu0
    %v2144 = vmax.f32 %v2136, 0.0
    %v2145 = vmax.f32 %v2138, 0.0
    %v2146 = vmax.f32 %v2140, 0.0
    %v2147 = vmax.f32 %v2142, 0.0
    %v2148 = vpack.c.bf16 %v2146, %v2144
    %v2149 = vpack.c.bf16 %v2147, %v2145
    %v2152 = vunpack.c.l.b16 %v2148
    %v2153 = vunpack.c.l.b16 %v2149
    %v2154 = vunpack.c.h.b16 %v2148
    %v2155 = vunpack.c.h.b16 %v2149
    %v2156 = vpack.c.b16 %v2153, %v2152
    %v2157 = vpack.c.b16 %v2155, %v2154
    %2160 = vst [vmem:[%s9] sm:$0xff] %v2156
    %2161 = vst [vmem:[%s9 + $0x8] sm:$0xff] %v2157
    %v2162 = vld [vmem:[%s5] sm:$0xf]
    %v2163 = vld [vmem:[%s5 + $0x4] sm:$0xf]
    %v2164 = vld [vmem:[%s5 + $0x8] sm:$0xf]
    %v2165 = vld [vmem:[%s5 + $0xc] sm:$0xf]
    %v2166 = vld [vmem:[%s5 + $0x10] sm:$0xf]
    %v2167 = vld [vmem:[%s5 + $0x14] sm:$0xf]
    %v2168 = vld [vmem:[%s5 + $0x18] sm:$0xf]
    %v2169 = vld [vmem:[%s5 + $0x1c] sm:$0xf]
    %v2170 = vld [vmem:[%s5 + $0x20] sm:$0xf]
    %v2171 = vld [vmem:[%s5 + $0x24] sm:$0xf]
    %v2172 = vld [vmem:[%s5 + $0x28] sm:$0xf]
    %v2173 = vld [vmem:[%s5 + $0x2c] sm:$0xf]
    %v2174 = vld [vmem:[%s5 + $0x30] sm:$0xf]
    %v2175 = vld [vmem:[%s5 + $0x34] sm:$0xf]
    %v2176 = vld [vmem:[%s5 + $0x38] sm:$0xf]
    %v2177 = vld [vmem:[%s5 + $0x3c] sm:$0xf]
    %v2178 = vld [vmem:[%s5 + $0x40] sm:$0xf]
    %v2179 = vld [vmem:[%s5 + $0x44] sm:$0xf]
    %v2180 = vld [vmem:[%s5 + $0x48] sm:$0xf]
    %v2181 = vld [vmem:[%s5 + $0x4c] sm:$0xf]
    %v2182 = vld [vmem:[%s5 + $0x50] sm:$0xf]
    %v2183 = vld [vmem:[%s5 + $0x54] sm:$0xf]
    %v2184 = vld [vmem:[%s5 + $0x58] sm:$0xf]
    %v2185 = vld [vmem:[%s5 + $0x5c] sm:$0xf]
    %v2186 = vld [vmem:[%s5 + $0x60] sm:$0xf]
    %v2187 = vld [vmem:[%s5 + $0x64] sm:$0xf]
    %v2188 = vld [vmem:[%s5 + $0x68] sm:$0xf]
    %v2189 = vld [vmem:[%s5 + $0x6c] sm:$0xf]
    %v2190 = vld [vmem:[%s5 + $0x70] sm:$0xf]
    %v2191 = vld [vmem:[%s5 + $0x74] sm:$0xf]
    %v2192 = vld [vmem:[%s5 + $0x78] sm:$0xf]
    %v2193 = vld [vmem:[%s5 + $0x7c] sm:$0xf]
    %v2194 = vld [vmem:[%s6] sm:$0x1]
    %v2196 = vlaneseq
    %v2197 = vshrl.u32 %v2196, 7
    %v2198 = vsub.s32 0, %v2197
    %v2199 = vrot.slane %v2194, %v2198
    %v2233 = vunpack.c.l.b16 %v2162
    %v2234 = vunpack.c.l.b16 %v2163
    %v2235 = vunpack.c.l.b16 %v2164
    %v2236 = vunpack.c.l.b16 %v2165
    %v2237 = vunpack.c.l.b16 %v2166
    %v2238 = vunpack.c.l.b16 %v2167
    %v2239 = vunpack.c.l.b16 %v2168
    %v2240 = vunpack.c.l.b16 %v2169
    %v2241 = vunpack.c.l.b16 %v2170
    %v2242 = vunpack.c.l.b16 %v2171
    %v2243 = vunpack.c.l.b16 %v2172
    %v2244 = vunpack.c.l.b16 %v2173
    %v2245 = vunpack.c.l.b16 %v2174
    %v2246 = vunpack.c.l.b16 %v2175
    %v2247 = vunpack.c.l.b16 %v2176
    %v2248 = vunpack.c.l.b16 %v2177
    %v2249 = vunpack.c.l.b16 %v2178
    %v2250 = vunpack.c.l.b16 %v2179
    %v2251 = vunpack.c.l.b16 %v2180
    %v2252 = vunpack.c.l.b16 %v2181
    %v2253 = vunpack.c.l.b16 %v2182
    %v2254 = vunpack.c.l.b16 %v2183
    %v2255 = vunpack.c.l.b16 %v2184
    %v2256 = vunpack.c.l.b16 %v2185
    %v2257 = vunpack.c.l.b16 %v2186
    %v2258 = vunpack.c.l.b16 %v2187
    %v2259 = vunpack.c.l.b16 %v2188
    %v2260 = vunpack.c.l.b16 %v2189
    %v2261 = vunpack.c.l.b16 %v2190
    %v2262 = vunpack.c.l.b16 %v2191
    %v2263 = vunpack.c.l.b16 %v2192
    %v2264 = vunpack.c.l.b16 %v2193
    %v2265 = vpack.c.b16 %v2234, %v2233
    %v2266 = vpack.c.b16 %v2236, %v2235
    %v2267 = vpack.c.b16 %v2238, %v2237
    %v2268 = vpack.c.b16 %v2240, %v2239
    %v2269 = vpack.c.b16 %v2242, %v2241
    %v2270 = vpack.c.b16 %v2244, %v2243
    %v2271 = vpack.c.b16 %v2246, %v2245
    %v2272 = vpack.c.b16 %v2248, %v2247
    %v2273 = vpack.c.b16 %v2250, %v2249
    %v2274 = vpack.c.b16 %v2252, %v2251
    %v2275 = vpack.c.b16 %v2254, %v2253
    %v2276 = vpack.c.b16 %v2256, %v2255
    %v2277 = vpack.c.b16 %v2258, %v2257
    %v2278 = vpack.c.b16 %v2260, %v2259
    %v2279 = vpack.c.b16 %v2262, %v2261
    %v2280 = vpack.c.b16 %v2264, %v2263
    %2297 = vmatprep.subr.bf16.mxu0 0
    %2298 = vmatpush1.bf16.msra.mxu0 %v2265
    %2299 = vmatprep.subr.bf16.mxu0 0
    %2300 = vmatpush1.bf16.msra.mxu0 %v2266
    %2301 = vmatprep.subr.bf16.mxu0 0
    %2302 = vmatpush1.bf16.msra.mxu0 %v2267
    %2303 = vmatprep.subr.bf16.mxu0 0
    %2304 = vmatpush1.bf16.msra.mxu0 %v2268
    %2305 = vmatprep.subr.bf16.mxu0 0
    %2306 = vmatpush1.bf16.msra.mxu0 %v2269
    %2307 = vmatprep.subr.bf16.mxu0 0
    %2308 = vmatpush1.bf16.msra.mxu0 %v2270
    %2309 = vmatprep.subr.bf16.mxu0 0
    %2310 = vmatpush1.bf16.msra.mxu0 %v2271
    %2311 = vmatprep.subr.bf16.mxu0 0
    %2312 = vmatpush1.bf16.msra.mxu0 %v2272
    %2313 = vmatprep.subr.bf16.mxu0 0
    %2314 = vmatpush1.bf16.msra.mxu0 %v2273
    %2315 = vmatprep.subr.bf16.mxu0 0
    %2316 = vmatpush1.bf16.msra.mxu0 %v2274
    %2317 = vmatprep.subr.bf16.mxu0 0
    %2318 = vmatpush1.bf16.msra.mxu0 %v2275
    %2319 = vmatprep.subr.bf16.mxu0 0
    %2320 = vmatpush1.bf16.msra.mxu0 %v2276
    %2321 = vmatprep.subr.bf16.mxu0 0
    %2322 = vmatpush1.bf16.msra.mxu0 %v2277
    %2323 = vmatprep.subr.bf16.mxu0 0
    %2324 = vmatpush1.bf16.msra.mxu0 %v2278
    %2325 = vmatprep.subr.bf16.mxu0 0
    %2326 = vmatpush1.bf16.msra.mxu0 %v2279
    %2327 = vmatprep.subr.bf16.mxu0 0
    %2328 = vmatpush1.bf16.msra.mxu0 %v2280
    %2329 = vmatprep.mubr.bf16.mxu0 %v2149
    %2330 = vmatmul.mubr.bf16.gmra.mrb[0].mxu0 %v2148
    %v2331 = vpop.f32.mrb[0].mxu0
    %v2332 = vadd.f32 %v2199, %v2331
    %v2333 = vpop.f32.mrb[0].mxu0
    %v2334 = vpop.f32.mrb[0].mxu0
    %v2335 = vadd.f32 %v2199, %v2334
    %v2336 = vpop.f32.mrb[0].mxu0
    %2337 = vdwg.mxu0
    %v2338 = vpack.c.bf16 %v2335, %v2332
    %v2340 = vunpack.c.l.b16 %v2338
    %v2341 = vunpack.c.h.b16 %v2338
    %v2342 = vpack.c.b16 %v2340, %v2340
    %v2343 = vpack.c.b16 %v2341, %v2341
    %vm2346 = vcmask 76800
    %2347 = vst.msk [vmem:[%s10] sm:$0xf] %vm2346, %v2342
    %2348 = vst.msk [vmem:[%s10 + $0x4] sm:$0xf] %vm2346, %v2343
    %vm2349 = vcmask 80896
    %v2350 = vsel %vm2349, %v2332, -inf
    %2351 = vmax.xlane.f32.xlu0 %v2350
    %v2352 = vpop.xlane.xlu0 %2351
    %v2353 = vsel %vm2349, %v2335, -inf
    %2354 = vmax.xlane.f32.xlu0 %v2353
    %v2355 = vpop.xlane.xlu0 %2354
    %v2356 = vsub.f32 %v2332, %v2352
    %v2357 = vsub.f32 %v2335, %v2355
    %v2358 = vmul.f32 %v2356, 1.442695
    %v2359 = vpow.pop %v2358
    %v2360 = vmul.f32 %v2357, 1.442695
    %v2361 = vpow.pop %v2360
    %v2362 = vsel %vm2349, %v2359, 0.0
    %2363 = vadd.xlane.f32.xlu0 %v2362
    %v2364 = vpop.xlane.xlu0 %2363
    %v2365 = vsel %vm2349, %v2361, 0.0
    %2366 = vadd.xlane.f32.xlu0 %v2365
    %v2367 = vpop.xlane.xlu0 %2366
    %v2368 = vrcp.pop %v2364
    %v2369 = vrcp.pop %v2367
    %v2370 = vmul.f32 %v2359, %v2368
    %v2371 = vmul.f32 %v2361, %v2369
    %2372 = vst.msk [vmem:[%s7] sm:$0xff] %vm2349, %v2370
    %2373 = vst.msk [vmem:[%s7 + $0x8] sm:$0xff] %vm2349, %v2371
    // Predicated region
    $region38: #{mlp_forward.1} parent=1 // pred_check
      _
    $region39: #{mlp_forward.1} parent=1 // pred_check_branch
      %2375 = sbr.rel (0) target = $region41
    $region40: #{mlp_forward.1} parent=1 // pred_region
      _
    $region41: #{mlp_forward.1} parent=1 // pred_fallthru
      _
    // Predicated region
    $region42: #{mlp_forward.1} parent=1 // pred_check
      _
    $region43: #{mlp_forward.1} parent=1 // pred_check_branch
      %2377 = sbr.rel (0) target = $region45
    $region44: #{mlp_forward.1} parent=1 // pred_region
      _
    $region45: #{mlp_forward.1} parent=1 // pred_fallthru
      _
    // Predicated region
    $region46: #{mlp_forward.1} parent=1 // pred_check
      _
    $region47: #{mlp_forward.1} parent=1 // pred_check_branch
      %2379 = sbr.rel (0) target = $region49
    $region48: #{mlp_forward.1} parent=1 // pred_region
      _
    $region49: #{mlp_forward.1} parent=1 // pred_fallthru
      _
    // Predicated region
    $region50: #{mlp_forward.1} parent=1 // pred_check
      _
    $region51: #{mlp_forward.1} parent=1 // pred_check_branch
      %2381 = sbr.rel (0) target = $region53
    $region52: #{mlp_forward.1} parent=1 // pred_region
      _
    $region53: #{mlp_forward.1} parent=1 // pred_fallthru
      _
    // Predicated region
    $region54: #{mlp_forward.1} parent=1 // pred_check
      _
    $region55: #{mlp_forward.1} parent=1 // pred_check_branch
      %2383 = sbr.rel (0) target = $region57
    $region56: #{mlp_forward.1} parent=1 // pred_region
      _
    $region57: #{mlp_forward.1} parent=1 // pred_fallthru
      _
    // Predicated region
    $region58: #{mlp_forward.1} parent=1 // pred_check
      _
    $region59: #{mlp_forward.1} parent=1 // pred_check_branch
      %2385 = sbr.rel (0) target = $region61
    $region60: #{mlp_forward.1} parent=1 // pred_region
      _
    $region61: #{mlp_forward.1} parent=1 // pred_fallthru
      _
    // Predicated region
    $region62: #{mlp_forward.1} parent=1 // pred_check
      _
    $region63: #{mlp_forward.1} parent=1 // pred_check_branch
      %2387 = sbr.rel (0) target = $region65
    $region64: #{mlp_forward.1} parent=1 // pred_region
      _
    $region65: #{mlp_forward.1} parent=1 // pred_fallthru
      _
    // Predicated region
    $region66: #{mlp_forward.1} parent=1 // pred_check
      _
    $region67: #{mlp_forward.1} parent=1 // pred_check_branch
      %2389 = sbr.rel (0) target = $region69
    $region68: #{mlp_forward.1} parent=1 // pred_region
      _
    $region69: #{mlp_forward.1} parent=1 // pred_fallthru
      _
    %2390 = vsyncpa [#allocation3], 1
    %2391 = vsyncpa [#allocation5], 1

</llo_original>
